<compile_context>
chip_gen: v7x
topology: tpu7x:2x2x1
jax: 0.10.0
libtpu: 0.0.40
codegen_flags: <defaults>
</compile_context>

<pallas_src>
import functools
import math

import jax
import jax.numpy as jnp
from jax import lax
from jax.experimental import pallas as pl
from jax.experimental.pallas import tpu as pltpu

_HIGHEST = jax.lax.Precision.HIGHEST


def _cdiv(a, b):
    return -(-a // b)


def _round_up(a, b):
    return _cdiv(a, b) * b


def _l2_normalize(x, eps=1e-12):
    """torch.nn.functional.normalize(x, p=2, dim=-1): x / max(||x||_2, eps)."""
    norm = jnp.sqrt(jnp.sum(x * x, axis=-1, keepdims=True))
    return x / jnp.maximum(norm, eps)


# ------------------------------ pass 1 kernel ------------------------------ #
def _rff_colsum_kernel(v1_ref, v2_ref, w_ref, negc_ref, negs_ref, *,
                       batch, rff_dim, block_rows):
    i = pl.program_id(0)
    row_ids = lax.broadcasted_iota(jnp.int32, (block_rows, 1), 0) + i * block_rows
    valid = row_ids < batch                                   # mask zero-padded tail rows

    z1 = _l2_normalize(v1_ref[...].astype(jnp.float32))
    z2 = _l2_normalize(v2_ref[...].astype(jnp.float32))
    w = w_ref[...].astype(jnp.float32)

    out1 = jnp.dot(z1, w, preferred_element_type=jnp.float32, precision=_HIGHEST)
    out2 = jnp.dot(z2, w, preferred_element_type=jnp.float32, precision=_HIGHEST)

    scale = math.sqrt(1.0 / rff_dim)                          # np.sqrt(1/D) in the reference
    cos_sum = scale * jnp.sum(
        jnp.where(valid, jnp.cos(out1) + jnp.cos(out2), 0.0), axis=0, keepdims=True)
    sin_sum = scale * jnp.sum(
        jnp.where(valid, jnp.sin(out1) + jnp.sin(out2), 0.0), axis=0, keepdims=True)

    # (8, rff_dim) output block keeps the store (8,128)-tile aligned; every
    # sublane carries the same partial sum, the wrapper reads sublane 0.
    negc_ref[...] = jnp.broadcast_to(cos_sum, (8, rff_dim)).astype(negc_ref.dtype)
    negs_ref[...] = jnp.broadcast_to(sin_sum, (8, rff_dim)).astype(negs_ref.dtype)


# ------------------------------ pass 2 kernel ------------------------------ #
def _infonce_loss_kernel(v1_ref, v2_ref, w_ref, ncos_ref, nsin_ref, loss_ref, *,
                         batch, temperature, rff_dim, block_rows):
    i = pl.program_id(0)
    row_ids = lax.broadcasted_iota(jnp.int32, (block_rows, 1), 0) + i * block_rows
    valid = row_ids < batch

    z1 = _l2_normalize(v1_ref[...].astype(jnp.float32))
    z2 = _l2_normalize(v2_ref[...].astype(jnp.float32))
    w = w_ref[...].astype(jnp.float32)

    sim = jnp.sum(z1 * z2, axis=-1, keepdims=True)            # (br, 1) positives

    out1 = jnp.dot(z1, w, preferred_element_type=jnp.float32, precision=_HIGHEST)
    out2 = jnp.dot(z2, w, preferred_element_type=jnp.float32, precision=_HIGHEST)

    scale = math.sqrt(1.0 / rff_dim)
    ncos = ncos_ref[...].astype(jnp.float32)                  # (1, rff_dim)
    nsin = nsin_ref[...].astype(jnp.float32)

    # rff_i . neg_sum, without materializing the concatenated RFF matrix.
    dot1 = scale * (jnp.sum(jnp.cos(out1) * ncos, axis=-1, keepdims=True)
                    + jnp.sum(jnp.sin(out1) * nsin, axis=-1, keepdims=True))
    dot2 = scale * (jnp.sum(jnp.cos(out2) * ncos, axis=-1, keepdims=True)
                    + jnp.sum(jnp.sin(out2) * nsin, axis=-1, keepdims=True))

    efac = math.exp(1.0 / temperature)                        # np.exp(1/temp) in reference
    nominator = jnp.where(valid, jnp.exp(sim / temperature), 1.0)
    denom1 = jnp.where(valid, efac * dot1, 1.0)
    denom2 = jnp.where(valid, efac * dot2, 1.0)

    losses = -jnp.log(nominator / denom1) - jnp.log(nominator / denom2)
    loss_ref[...] = jnp.where(valid, losses, 0.0).astype(loss_ref.dtype)


# -------------------------------- wrapper ---------------------------------- #
def infonce_linear_forward(view1, view2, w, temperature, *,
                           max_block_rows=512,
                           block_vmem_budget=16 * 1024 * 1024):
    """Forward of InfoNCE_Linear. view1/view2: (batch, hidden); w: (hidden, 8*hidden)."""
    assert view1.shape == view2.shape and view1.ndim == 2
    batch, hidden = view1.shape
    rff_dim = int(w.shape[1])

    # Row blocking: large sublane-aligned blocks, zero-pad the tail (masked in-kernel).
    rows8 = _round_up(batch, 8)
    # rough per-row VMEM need (f32): double-buffered inputs + matmul/cos/sin temps
    per_row_bytes = 4 * (2 * hidden * 2 + 6 * rff_dim)
    cap = block_vmem_budget // max(per_row_bytes, 1)
    cap = max(8, min(max_block_rows, (cap // 8) * 8))
    grid_n = _cdiv(rows8, cap)
    block_rows = _round_up(_cdiv(rows8, grid_n), 8)
    rows_p = block_rows * grid_n
    # TODO(synk): for very large hidden sizes also tile the rff_dim axis so the
    # (hidden, rff_dim) projection block fits comfortably in VMEM.

    v1p = jnp.pad(view1.astype(jnp.float32), ((0, rows_p - batch), (0, 0)))
    v2p = jnp.pad(view2.astype(jnp.float32), ((0, rows_p - batch), (0, 0)))
    w32 = w.astype(jnp.float32)

    cparams = pltpu.CompilerParams(
        dimension_semantics=("parallel",),            # row blocks are independent
        vmem_limit_bytes=48 * 1024 * 1024)            # below v7x's 64 MiB physical

    matmul_flops = 4 * rows_p * hidden * rff_dim      # 2 views x (2*M*K*N)
    trans_ops = 4 * rows_p * rff_dim                  # cos + sin for both views

    # ---- pass 1: global column sum of the RFF features ("neg_sum") --------
    negp_cos, negp_sin = pl.pallas_call(
        functools.partial(_rff_colsum_kernel, batch=batch, rff_dim=rff_dim,
                          block_rows=block_rows),
        out_shape=(jax.ShapeDtypeStruct((8 * grid_n, rff_dim), jnp.float32),
                   jax.ShapeDtypeStruct((8 * grid_n, rff_dim), jnp.float32)),
        grid_spec=pltpu.PrefetchScalarGridSpec(
            num_scalar_prefetch=0,
            grid=(grid_n,),
            in_specs=[
                pl.BlockSpec((block_rows, hidden), lambda i: (i, 0)),
                pl.BlockSpec((block_rows, hidden), lambda i: (i, 0)),
                pl.BlockSpec((hidden, rff_dim), lambda i: (0, 0)),
            ],
            out_specs=[
                pl.BlockSpec((8, rff_dim), lambda i: (i, 0)),
                pl.BlockSpec((8, rff_dim), lambda i: (i, 0)),
            ]),
        compiler_params=cparams,
        cost_estimate=pl.CostEstimate(
            flops=matmul_flops, transcendentals=trans_ops,
            bytes_accessed=4 * (2 * rows_p * hidden + hidden * rff_dim
                                + 16 * grid_n * rff_dim)),
    )(v1p, v2p, w32)

    # One partial per grid block (identical across 8 sublanes) -> tiny reduce.
    neg_cos = jnp.sum(negp_cos[0::8, :], axis=0, keepdims=True)   # (1, rff_dim)
    neg_sin = jnp.sum(negp_sin[0::8, :], axis=0, keepdims=True)

    # ---- pass 2: per-row InfoNCE loss terms --------------------------------
    loss_rows = pl.pallas_call(
        functools.partial(_infonce_loss_kernel, batch=batch,
                          temperature=float(temperature), rff_dim=rff_dim,
                          block_rows=block_rows),
        out_shape=jax.ShapeDtypeStruct((rows_p, 1), jnp.float32),
        grid_spec=pltpu.PrefetchScalarGridSpec(
            num_scalar_prefetch=0,
            grid=(grid_n,),
            in_specs=[
                pl.BlockSpec((block_rows, hidden), lambda i: (i, 0)),
                pl.BlockSpec((block_rows, hidden), lambda i: (i, 0)),
                pl.BlockSpec((hidden, rff_dim), lambda i: (0, 0)),
                pl.BlockSpec((1, rff_dim), lambda i: (0, 0)),
                pl.BlockSpec((1, rff_dim), lambda i: (0, 0)),
            ],
            out_specs=pl.BlockSpec((block_rows, 1), lambda i: (i, 0))),
        compiler_params=cparams,
        cost_estimate=pl.CostEstimate(
            flops=matmul_flops, transcendentals=trans_ops,
            bytes_accessed=4 * (2 * rows_p * hidden + hidden * rff_dim
                                + 2 * rff_dim + rows_p)),
    )(v1p, v2p, w32, neg_cos, neg_sin)

    return jnp.sum(loss_rows) / (2.0 * batch)


# ------------------------------- reference --------------------------------- #
def infonce_linear_ref(view1, view2, w, temperature):
    """Literal jax.numpy port of InfoNCE_Linear.forward / approx_infonce / rff_transform."""
    batch = view1.shape[0]
    v1 = _l2_normalize(view1)
    v2 = _l2_normalize(view2)
    sim_ij = jnp.sum(v1 * v2, axis=1)
    positives = jnp.concatenate([sim_ij, sim_ij], axis=0)
    nominator = jnp.exp(positives / temperature)

    # approx_infonce(v1, v2, temperature, rff_dim) with the random draw `w` passed in.
    z1 = _l2_normalize(v1)
    z2 = _l2_normalize(v2)
    z = jnp.concatenate([z1, z2], axis=0)
    d = w.shape[1]
    out = jnp.dot(z, w, precision=_HIGHEST)
    rff = math.sqrt(1.0 / d) * jnp.concatenate([jnp.cos(out), jnp.sin(out)], axis=1)
    rff1, rff2 = rff[:batch], rff[batch:]
    neg_sum = jnp.sum(rff, axis=0, keepdims=True)
    neg1 = math.exp(1.0 / temperature) * jnp.sum(rff1 * neg_sum, axis=1)
    neg2 = math.exp(1.0 / temperature) * jnp.sum(rff2 * neg_sum, axis=1)
    denominator = jnp.concatenate([neg1, neg2], axis=0)
    losses = -jnp.log(nominator / denominator)
    return jnp.sum(losses) / (2 * batch)


if __name__ == "__main__":
    key = jax.random.PRNGKey(0)
    k1, k2, kw = jax.random.split(key, 3)

    batch, hidden = 10, 32            # batch not a multiple of 8 -> exercises tail masking
    temperature = 0.5
    rff_dim = 8 * hidden              # InfoNCE_Linear uses rff_dim = 8 * args.hidden_size

    view1 = jax.random.normal(k1, (batch, hidden), dtype=jnp.float32)
    view2 = jax.random.normal(k2, (batch, hidden), dtype=jnp.float32)
    # The PyTorch module draws w = randn(hidden, rff_dim)/sqrt(temp) inside forward();
    # here the same draw is made explicitly so kernel and reference share it.
    w = jax.random.normal(kw, (hidden, rff_dim), dtype=jnp.float32) / math.sqrt(temperature)

    loss = infonce_linear_forward(view1, view2, w, temperature)
    loss = jax.block_until_ready(loss)

    ref = infonce_linear_ref(view1, view2, w, temperature)
    assert loss.shape == ()
    assert bool(jnp.isfinite(loss))
    assert jnp.allclose(loss, ref, rtol=1e-4, atol=1e-4), (float(loss), float(ref))
    print("KERNEL_OK")
</pallas_src>

<mosaic_0001>
module attributes {stable_mosaic.version = 11 : i64} {
  func.func @_rff_colsum_kernel(%arg0: i32, %arg1: memref<16x32xf32, #tpu.memory_space<vmem>>, %arg2: memref<16x32xf32, #tpu.memory_space<vmem>>, %arg3: memref<32x256xf32, #tpu.memory_space<vmem>>, %arg4: memref<8x256xf32, #tpu.memory_space<vmem>>, %arg5: memref<8x256xf32, #tpu.memory_space<vmem>>) attributes {dimension_semantics = [#tpu.dimension_semantics<parallel>], iteration_bounds = array<i64: 1>, scalar_prefetch = 0 : i64, scratch_operands = 0 : i64, tpu.core_type = #tpu.core_type<tc>, window_params = [{transform_indices = @transform_0, window_bounds = array<i64: 16, 32>}, {transform_indices = @transform_1, window_bounds = array<i64: 16, 32>}, {pipeline_mode = #tpu.pipeline_mode<synchronous>, transform_indices = @transform_2, window_bounds = array<i64: 32, 256>}, {transform_indices = @transform_3, window_bounds = array<i64: 8, 256>}, {transform_indices = @transform_4, window_bounds = array<i64: 8, 256>}]} {
    %0 = tpu.iota {dimensions = array<i32: 0>} : vector<16x1xi32>
    %c16_i32 = arith.constant 16 : i32
    %1 = arith.muli %arg0, %c16_i32 : i32
    %2 = vector.broadcast %1 : i32 to vector<16x1xi32>
    %3 = arith.addi %0, %2 : vector<16x1xi32>
    %c10_i32 = arith.constant 10 : i32
    %4 = vector.broadcast %c10_i32 : i32 to vector<16x1xi32>
    %5 = arith.cmpi slt, %3, %4 : vector<16x1xi32>
    %c0 = arith.constant 0 : index
    %c0_0 = arith.constant 0 : index
    %6 = vector.load %arg1[%c0, %c0_0] : memref<16x32xf32, #tpu.memory_space<vmem>>, vector<16x32xf32>
    %7 = arith.mulf %6, %6 : vector<16x32xf32>
    %cst = arith.constant dense<0.000000e+00> : vector<16xf32>
    %8 = vector.multi_reduction <add>, %7, %cst [1] : vector<16x32xf32> to vector<16xf32>
    %9 = vector.shape_cast %8 : vector<16xf32> to vector<16x1xf32>
    %10 = math.sqrt %9 : vector<16x1xf32>
    %cst_1 = arith.constant 9.99999996E-13 : f32
    %11 = vector.broadcast %cst_1 : f32 to vector<16x1xf32>
    %12 = arith.maximumf %10, %11 : vector<16x1xf32>
    %13 = vector.broadcast %12 : vector<16x1xf32> to vector<16x32xf32>
    %14 = arith.divf %6, %13 : vector<16x32xf32>
    %c0_2 = arith.constant 0 : index
    %c0_3 = arith.constant 0 : index
    %15 = vector.load %arg2[%c0_2, %c0_3] : memref<16x32xf32, #tpu.memory_space<vmem>>, vector<16x32xf32>
    %16 = arith.mulf %15, %15 : vector<16x32xf32>
    %cst_4 = arith.constant dense<0.000000e+00> : vector<16xf32>
    %17 = vector.multi_reduction <add>, %16, %cst_4 [1] : vector<16x32xf32> to vector<16xf32>
    %18 = vector.shape_cast %17 : vector<16xf32> to vector<16x1xf32>
    %19 = math.sqrt %18 : vector<16x1xf32>
    %cst_5 = arith.constant 9.99999996E-13 : f32
    %20 = vector.broadcast %cst_5 : f32 to vector<16x1xf32>
    %21 = arith.maximumf %19, %20 : vector<16x1xf32>
    %22 = vector.broadcast %21 : vector<16x1xf32> to vector<16x32xf32>
    %23 = arith.divf %15, %22 : vector<16x32xf32>
    %c0_6 = arith.constant 0 : index
    %c0_7 = arith.constant 0 : index
    %24 = vector.load %arg3[%c0_6, %c0_7] : memref<32x256xf32, #tpu.memory_space<vmem>>, vector<32x256xf32>
    %cst_8 = arith.constant dense<0.000000e+00> : vector<16x256xf32>
    %25 = tpu.matmul %14, %24, %cst_8 {dimension_numbers = #tpu.dot_dimension_numbers<[1], [0], [0], [1], [0, 0, 1, 1], [], []>, precision = #tpu.contract_precision<fp32>} : vector<16x32xf32>, vector<32x256xf32>, vector<16x256xf32> -> vector<16x256xf32>
    %cst_9 = arith.constant dense<0.000000e+00> : vector<16x256xf32>
    %26 = tpu.matmul %23, %24, %cst_9 {dimension_numbers = #tpu.dot_dimension_numbers<[1], [0], [0], [1], [0, 0, 1, 1], [], []>, precision = #tpu.contract_precision<fp32>} : vector<16x32xf32>, vector<32x256xf32>, vector<16x256xf32> -> vector<16x256xf32>
    %27 = math.cos %25 : vector<16x256xf32>
    %28 = math.cos %26 : vector<16x256xf32>
    %29 = arith.addf %27, %28 : vector<16x256xf32>
    %cst_10 = arith.constant 0.000000e+00 : f32
    %30 = vector.shape_cast %5 : vector<16x1xi1> to vector<16x1xi1>
    %31 = vector.broadcast %30 : vector<16x1xi1> to vector<16x256xi1>
    %32 = vector.broadcast %cst_10 : f32 to vector<16x256xf32>
    %33 = arith.select %31, %29, %32 : vector<16x256xi1>, vector<16x256xf32>
    %cst_11 = arith.constant dense<0.000000e+00> : vector<256xf32>
    %34 = vector.multi_reduction <add>, %33, %cst_11 [0] : vector<16x256xf32> to vector<256xf32>
    %35 = vector.shape_cast %34 : vector<256xf32> to vector<1x256xf32>
    %cst_12 = arith.constant 6.250000e-02 : f32
    %36 = vector.broadcast %cst_12 : f32 to vector<1x256xf32>
    %37 = arith.mulf %36, %35 : vector<1x256xf32>
    %38 = math.sin %25 : vector<16x256xf32>
    %39 = math.sin %26 : vector<16x256xf32>
    %40 = arith.addf %38, %39 : vector<16x256xf32>
    %cst_13 = arith.constant 0.000000e+00 : f32
    %41 = vector.shape_cast %5 : vector<16x1xi1> to vector<16x1xi1>
    %42 = vector.broadcast %41 : vector<16x1xi1> to vector<16x256xi1>
    %43 = vector.broadcast %cst_13 : f32 to vector<16x256xf32>
    %44 = arith.select %42, %40, %43 : vector<16x256xi1>, vector<16x256xf32>
    %cst_14 = arith.constant dense<0.000000e+00> : vector<256xf32>
    %45 = vector.multi_reduction <add>, %44, %cst_14 [0] : vector<16x256xf32> to vector<256xf32>
    %46 = vector.shape_cast %45 : vector<256xf32> to vector<1x256xf32>
    %cst_15 = arith.constant 6.250000e-02 : f32
    %47 = vector.broadcast %cst_15 : f32 to vector<1x256xf32>
    %48 = arith.mulf %47, %46 : vector<1x256xf32>
    %49 = vector.shape_cast %37 : vector<1x256xf32> to vector<1x256xf32>
    %50 = vector.broadcast %49 : vector<1x256xf32> to vector<8x256xf32>
    %c0_16 = arith.constant 0 : index
    %c0_17 = arith.constant 0 : index
    %51 = vector.load %arg4[%c0_16, %c0_17] : memref<8x256xf32, #tpu.memory_space<vmem>>, vector<8x256xf32>
    tpu.vector_store %arg4[%c0_16, %c0_17], %50 {strides = array<i32>} : memref<8x256xf32, #tpu.memory_space<vmem>>, vector<8x256xf32>,
    %52 = vector.shape_cast %48 : vector<1x256xf32> to vector<1x256xf32>
    %53 = vector.broadcast %52 : vector<1x256xf32> to vector<8x256xf32>
    %c0_18 = arith.constant 0 : index
    %c0_19 = arith.constant 0 : index
    %54 = vector.load %arg5[%c0_18, %c0_19] : memref<8x256xf32, #tpu.memory_space<vmem>>, vector<8x256xf32>
    tpu.vector_store %arg5[%c0_18, %c0_19], %53 {strides = array<i32>} : memref<8x256xf32, #tpu.memory_space<vmem>>, vector<8x256xf32>,
    return
  }
  func.func @transform_0(%arg0: i32) -> (i32, i32) {
    %c0_i32 = arith.constant 0 : i32
    %c0_i32_0 = arith.constant 0 : i32
    return %arg0, %c0_i32 : i32, i32
  }
  func.func @transform_1(%arg0: i32) -> (i32, i32) {
    %c0_i32 = arith.constant 0 : i32
    %c0_i32_0 = arith.constant 0 : i32
    return %arg0, %c0_i32 : i32, i32
  }
  func.func @transform_2(%arg0: i32) -> (i32, i32) {
    %c0_i32 = arith.constant 0 : i32
    %c0_i32_0 = arith.constant 0 : i32
    %c0_i32_1 = arith.constant 0 : i32
    return %c0_i32, %c0_i32_0 : i32, i32
  }
  func.func @transform_3(%arg0: i32) -> (i32, i32) {
    %c0_i32 = arith.constant 0 : i32
    %c0_i32_0 = arith.constant 0 : i32
    return %arg0, %c0_i32 : i32, i32
  }
  func.func @transform_4(%arg0: i32) -> (i32, i32) {
    %c0_i32 = arith.constant 0 : i32
    %c0_i32_0 = arith.constant 0 : i32
    return %arg0, %c0_i32 : i32, i32
  }
}

</mosaic_0001>

<llo_original>
// kernel: tpu_custom_call.1
$region0: #{tpu_custom_call.1}
  #allocation0 [shape = 'u32[]', space=smem, size = 0x4, offset = 0x4, fixed_abs, tag = 'smem constant byte address 0x4 - core index']
  #allocation1 [shape = 'u32[144,128]{1,0:T(1,128)}', space=vmem, size = 0x12000, scoped, tag = 'internal scratch']
  %s0 = inlined_call_operand.hbm [shape: f32[16,32], index: 0, kind: input, shape index: {}]
  %s1 = inlined_call_operand.hbm [shape: f32[16,32], index: 1, kind: input, shape index: {}]
  %s2 = inlined_call_operand.hbm [shape: f32[32,256], index: 2, kind: input, shape index: {}]
  %s3 = inlined_call_operand.hbm [shape: f32[8,256], index: 3, kind: output, shape index: {0}]
  %s4 = inlined_call_operand.hbm [shape: f32[8,256], index: 4, kind: output, shape index: {1}]
  %5 = xla_tuple %s3, %s4
  %s6 = sld [smem:[#allocation0]]
  $region42: #{tpu_custom_call.1} parent=0
    _
  %s8 = ssub.s32 1, %s6
  %s9 = scalar_select 0, %s8, %s6
  $region1: #{tpu_custom_call.1} parent=0
    #allocation2 [shape = 'u8[8192]{0}', space=vmem, size = 0x2000, scoped, tag = 'input window, operand 0, single buffered']
    #allocation3 [shape = 's32[1]{0}', space=sflag, size = 0x4, scoped, tag = 'scoped memory for tpu_custom_call.1']
    #allocation4 [shape = 's32[1]{0}', space=sflag, size = 0x4, scoped, tag = 'scoped memory for tpu_custom_call.1']
    #allocation5 [shape = 'u8[8192]{0}', space=vmem, size = 0x2000, scoped, tag = 'input window, operand 1, single buffered']
    #allocation6 [shape = 's32[1]{0}', space=sflag, size = 0x4, scoped, tag = 'scoped memory for tpu_custom_call.1']
    #allocation7 [shape = 'u8[32768]{0}', space=vmem, size = 0x8000, scoped, tag = 'input window, operand 2, single buffered']
    #allocation8 [shape = 'u8[8192]{0}', space=vmem, size = 0x2000, scoped, tag = 'output window, operand 0, single buffered']
    #allocation9 [shape = 'u8[8192]{0}', space=vmem, size = 0x2000, scoped, tag = 'output window, operand 1, single buffered']
    #allocation10 [shape = 's32[1]{0}', space=sflag, size = 0x4, scoped, tag = 'scoped memory for tpu_custom_call.1']
    %10 = vsyncpa [#allocation3], 0
    %11 = vsyncpa [#allocation6], 0
    %12 = vsyncpa [#allocation4], 0
    %13 = vsyncpa [#allocation10], 0
    // Predicated region
    $region2: #{tpu_custom_call.1} parent=1 // pred_check
      _
    $region3: #{tpu_custom_call.1} parent=1 // pred_check_branch
      %15 = sbr.rel (0) target = $region5
    $region4: #{tpu_custom_call.1} parent=1 // pred_region
      %s17 = ssub.s32 256, 256
      %18 = vsyncadd [#allocation3], %s17
      %s19 = sshll.u32 [#allocation2], 4
      %s20 = int_to_ptr.vmem [resolvable:$true] %s19
      %25 = dma.hbm_to_vmem [thread:$0]  %s0, 256, %s20, [#allocation3], 128, 128, 8
    $region5: #{tpu_custom_call.1} parent=1 // pred_fallthru
      _
    // Predicated region
    $region6: #{tpu_custom_call.1} parent=1 // pred_check
      _
    $region7: #{tpu_custom_call.1} parent=1 // pred_check_branch
      %27 = sbr.rel (0) target = $region9
    $region8: #{tpu_custom_call.1} parent=1 // pred_region
      %s29 = ssub.s32 256, 256
      %30 = vsyncadd [#allocation6], %s29
      %s31 = sshll.u32 [#allocation5], 4
      %s32 = int_to_ptr.vmem [resolvable:$true] %s31
      %37 = dma.hbm_to_vmem [thread:$0]  %s1, 256, %s32, [#allocation6], 128, 128, 8
    $region9: #{tpu_custom_call.1} parent=1 // pred_fallthru
      _
    // Predicated region
    $region10: #{tpu_custom_call.1} parent=1 // pred_check
      _
    $region11: #{tpu_custom_call.1} parent=1 // pred_check_branch
      %39 = sbr.rel (0) target = $region13
    $region12: #{tpu_custom_call.1} parent=1 // pred_region
      %s41 = ssub.s32 1024, 1024
      %42 = vsyncadd [#allocation6], %s41
      %s43 = sshll.u32 [#allocation7], 4
      %s44 = int_to_ptr.vmem [resolvable:$true] %s43
      %49 = dma.hbm_to_vmem [thread:$0]  %s2, 1024, %s44, [#allocation6], 256, 256, 16
    $region13: #{tpu_custom_call.1} parent=1 // pred_fallthru
      _
    // Predicated region
    $region14: #{tpu_custom_call.1} parent=1 // pred_check
      _
    $region15: #{tpu_custom_call.1} parent=1 // pred_check_branch
      %51 = sbr.rel (0) target = $region17
    $region16: #{tpu_custom_call.1} parent=1 // pred_region
      %52 = dma.done [#allocation3], 256
    $region17: #{tpu_custom_call.1} parent=1 // pred_fallthru
      _
    // Predicated region
    $region18: #{tpu_custom_call.1} parent=1 // pred_check
      _
    $region19: #{tpu_custom_call.1} parent=1 // pred_check_branch
      %54 = sbr.rel (0) target = $region21
    $region20: #{tpu_custom_call.1} parent=1 // pred_region
      %55 = dma.done [#allocation6], 256
    $region21: #{tpu_custom_call.1} parent=1 // pred_fallthru
      _
    // Predicated region
    $region22: #{tpu_custom_call.1} parent=1 // pred_check
      _
    $region23: #{tpu_custom_call.1} parent=1 // pred_check_branch
      %57 = sbr.rel (0) target = $region25
    $region24: #{tpu_custom_call.1} parent=1 // pred_region
      %58 = dma.done [#allocation6], 1024
    $region25: #{tpu_custom_call.1} parent=1 // pred_fallthru
      _
    %v59 = vlaneseq
    %v60 = vshrl.u32 %v59, 7
    %v61 = vadd.s32 %v60, 8
    %s62 = smul.u32 0, 16
    %v63 = vstv %s62
    %v64 = vadd.s32 %v60, %v63
    %v65 = vadd.s32 %v61, %v63
    %vm66 = vcmp.lt.s32.totalorder %v64, 10
    %vm67 = vcmp.lt.s32.totalorder %v65, 10
    %v68 = vld [vmem:[#allocation2] sm:$0xff]
    %v69 = vld [vmem:[#allocation2 + $0x8] sm:$0xff]
    %v70 = vmul.f32 %v68, %v68
    %v71 = vmul.f32 %v69, %v69
    %vm72 = vcmask 261120
    %v73 = vsel %vm72, %v70, 0.0
    %74 = vadd.xlane.f32.xlu0 %v73
    %v75 = vpop.xlane.xlu0 %74
    %v76 = vsel %vm72, %v71, 0.0
    %77 = vadd.xlane.f32.xlu0 %v76
    %v78 = vpop.xlane.xlu0 %77
    %v79 = vrsqrt.pop %v75
    %v80 = vmul.f32 %v75, %v79
    %vm81 = vcmp.eq.f32.partialorder %v75, inf
    %v82 = vsel %vm81, %v75, %v80
    %vm83 = vcmp.eq.f32.partialorder %v75, 0.0
    %v84 = vand.u32 %v75, 2147483648
    %v85 = vsel %vm83, %v84, %v82
    %v86 = vrsqrt.pop %v78
    %v87 = vmul.f32 %v78, %v86
    %vm88 = vcmp.eq.f32.partialorder %v78, inf
    %v89 = vsel %vm88, %v78, %v87
    %vm90 = vcmp.eq.f32.partialorder %v78, 0.0
    %v91 = vand.u32 %v78, 2147483648
    %v92 = vsel %vm90, %v91, %v89
    %v93 = vmax.f32 %v85, 1e-12
    %v94 = vmax.f32 %v92, 1e-12
    %v95 = vrcp.pop %v93
    %v96 = vmul.f32 %v68, %v95
    %v97 = vrcp.pop %v94
    %v98 = vmul.f32 %v69, %v97
    %v99 = vld [vmem:[#allocation5] sm:$0xff]
    %v100 = vld [vmem:[#allocation5 + $0x8] sm:$0xff]
    %v101 = vmul.f32 %v99, %v99
    %v102 = vmul.f32 %v100, %v100
    %v103 = vsel %vm72, %v101, 0.0
    %104 = vadd.xlane.f32.xlu0 %v103
    %v105 = vpop.xlane.xlu0 %104
    %v106 = vsel %vm72, %v102, 0.0
    %107 = vadd.xlane.f32.xlu0 %v106
    %v108 = vpop.xlane.xlu0 %107
    %v109 = vrsqrt.pop %v105
    %v110 = vmul.f32 %v105, %v109
    %vm111 = vcmp.eq.f32.partialorder %v105, inf
    %v112 = vsel %vm111, %v105, %v110
    %vm113 = vcmp.eq.f32.partialorder %v105, 0.0
    %v114 = vand.u32 %v105, 2147483648
    %v115 = vsel %vm113, %v114, %v112
    %v116 = vrsqrt.pop %v108
    %v117 = vmul.f32 %v108, %v116
    %vm118 = vcmp.eq.f32.partialorder %v108, inf
    %v119 = vsel %vm118, %v108, %v117
    %vm120 = vcmp.eq.f32.partialorder %v108, 0.0
    %v121 = vand.u32 %v108, 2147483648
    %v122 = vsel %vm120, %v121, %v119
    %v123 = vmax.f32 %v115, 1e-12
    %v124 = vmax.f32 %v122, 1e-12
    %v125 = vrcp.pop %v123
    %v126 = vmul.f32 %v99, %v125
    %v127 = vrcp.pop %v124
    %v128 = vmul.f32 %v100, %v127
    %v129 = vld [vmem:[#allocation7] sm:$0xff]
    %v130 = vld [vmem:[#allocation7 + $0x8] sm:$0xff]
    %v131 = vld [vmem:[#allocation7 + $0x10] sm:$0xff]
    %v132 = vld [vmem:[#allocation7 + $0x18] sm:$0xff]
    %v133 = vld [vmem:[#allocation7 + $0x20] sm:$0xff]
    %v134 = vld [vmem:[#allocation7 + $0x28] sm:$0xff]
    %v135 = vld [vmem:[#allocation7 + $0x30] sm:$0xff]
    %v136 = vld [vmem:[#allocation7 + $0x38] sm:$0xff]
    %v138 = vsel %vm72, %v96, 0
    %v141 = vsel %vm72, %v98, 0
    %v143 = vand.u32 %v130, 4294901760
    %144 = vmatprep.subr.mxu0 %v143
    %v145 = vand.u32 %v129, 4294901760
    %146 = vmatpush1.msra.mxu0 %v145
    %v147 = vand.u32 %v132, 4294901760
    %148 = vmatprep.subr.mxu0 %v147
    %v149 = vand.u32 %v131, 4294901760
    %150 = vmatpush1.msra.mxu0 %v149
    %v151 = vand.u32 %v134, 4294901760
    %152 = vmatprep.subr.mxu0 %v151
    %v153 = vand.u32 %v133, 4294901760
    %154 = vmatpush1.msra.mxu0 %v153
    %v155 = vand.u32 %v136, 4294901760
    %156 = vmatprep.subr.mxu0 %v155
    %v157 = vand.u32 %v135, 4294901760
    %158 = vmatpush1.msra.mxu0 %v157
    %159 = vmatprep.subr.mxu0 0.0
    %160 = vmatpush1.msra.mxu0 0.0
    %161 = vmatprep.subr.mxu0 0.0
    %162 = vmatpush1.msra.mxu0 0.0
    %163 = vmatprep.subr.mxu0 0.0
    %164 = vmatpush1.msra.mxu0 0.0
    %165 = vmatprep.subr.mxu0 0.0
    %166 = vmatpush1.msra.mxu0 0.0
    %167 = vmatprep.subr.mxu0 0.0
    %168 = vmatpush1.msra.mxu0 0.0
    %169 = vmatprep.subr.mxu0 0.0
    %170 = vmatpush1.msra.mxu0 0.0
    %171 = vmatprep.subr.mxu0 0.0
    %172 = vmatpush1.msra.mxu0 0.0
    %173 = vmatprep.subr.mxu0 0.0
    %174 = vmatpush1.msra.mxu0 0.0
    %175 = vmatprep.subr.mxu0 0.0
    %176 = vmatpush1.msra.mxu0 0.0
    %177 = vmatprep.subr.mxu0 0.0
    %178 = vmatpush1.msra.mxu0 0.0
    %179 = vmatprep.subr.mxu0 0.0
    %180 = vmatpush1.msra.mxu0 0.0
    %181 = vmatprep.subr.mxu0 0.0
    %182 = vmatpush1.msra.mxu0 0.0
    %183 = vmatprep.subr.mxu0 0.0
    %184 = vmatpush1.msra.mxu0 0.0
    %185 = vmatprep.subr.mxu0 0.0
    %186 = vmatpush1.msra.mxu0 0.0
    %187 = vmatprep.subr.mxu0 0.0
    %188 = vmatpush1.msra.mxu0 0.0
    %189 = vmatprep.subr.mxu0 0.0
    %190 = vmatpush1.msra.mxu0 0.0
    %191 = vmatprep.subr.mxu0 0.0
    %192 = vmatpush1.msra.mxu0 0.0
    %193 = vmatprep.subr.mxu0 0.0
    %194 = vmatpush1.msra.mxu0 0.0
    %195 = vmatprep.subr.mxu0 0.0
    %196 = vmatpush1.msra.mxu0 0.0
    %197 = vmatprep.subr.mxu0 0.0
    %198 = vmatpush1.msra.mxu0 0.0
    %199 = vmatprep.subr.mxu0 0.0
    %200 = vmatpush1.msra.mxu0 0.0
    %201 = vmatprep.subr.mxu0 0.0
    %202 = vmatpush1.msra.mxu0 0.0
    %203 = vmatprep.subr.mxu0 0.0
    %204 = vmatpush1.msra.mxu0 0.0
    %205 = vmatprep.subr.mxu0 0.0
    %206 = vmatpush1.msra.mxu0 0.0
    %207 = vmatprep.subr.mxu0 0.0
    %208 = vmatpush1.msra.mxu0 0.0
    %209 = vmatprep.subr.mxu0 0.0
    %210 = vmatpush1.msra.mxu0 0.0
    %211 = vmatprep.subr.mxu0 0.0
    %212 = vmatpush1.msra.mxu0 0.0
    %213 = vmatprep.subr.mxu0 0.0
    %214 = vmatpush1.msra.mxu0 0.0
    %215 = vmatprep.mubr.f32.mxu0 0.0
    %v216 = vand.u32 %v138, 4294901760
    %v217 = vsub.f32 %v138, %v216
    %v218 = vand.u32 %v217, 4294901760
    %v219 = vsub.f32 %v217, %v218
    %v220 = vand.u32 %v219, 4294901760
    %221 = vmatmul.mubr.f32.gmra.mrb[0].mxu0 %v220
    %v222 = vpop.f32.mrb[0].mxu0
    %v223 = vadd.f32 0.0, %v222
    %v224 = vpop.f32.mrb[0].mxu0
    %v225 = vadd.f32 0.0, %v224
    %226 = vmatprep.mubr.f32.mxu0 0.0
    %v227 = vand.u32 %v141, 4294901760
    %v228 = vsub.f32 %v141, %v227
    %v229 = vand.u32 %v228, 4294901760
    %v230 = vsub.f32 %v228, %v229
    %v231 = vand.u32 %v230, 4294901760
    %232 = vmatmul.mubr.f32.gmra.mrb[0].mxu0 %v231
    %v233 = vpop.f32.mrb[0].mxu0
    %v234 = vadd.f32 0.0, %v233
    %v235 = vpop.f32.mrb[0].mxu0
    %v236 = vadd.f32 0.0, %v235
    %237 = vdwg.mxu0
    %v238 = vand.u32 %v130, 4294901760
    %v239 = vsub.f32 %v130, %v238
    %v240 = vand.u32 %v239, 4294901760
    %v241 = vsub.f32 %v239, %v240
    %v242 = vand.u32 %v241, 4294901760
    %243 = vmatprep.subr.mxu0 %v242
    %v244 = vand.u32 %v129, 4294901760
    %v245 = vsub.f32 %v129, %v244
    %v246 = vand.u32 %v245, 4294901760
    %v247 = vsub.f32 %v245, %v246
    %v248 = vand.u32 %v247, 4294901760
    %249 = vmatpush1.msra.mxu0 %v248
    %v250 = vand.u32 %v132, 4294901760
    %v251 = vsub.f32 %v132, %v250
    %v252 = vand.u32 %v251, 4294901760
    %v253 = vsub.f32 %v251, %v252
    %v254 = vand.u32 %v253, 4294901760
    %255 = vmatprep.subr.mxu0 %v254
    %v256 = vand.u32 %v131, 4294901760
    %v257 = vsub.f32 %v131, %v256
    %v258 = vand.u32 %v257, 4294901760
    %v259 = vsub.f32 %v257, %v258
    %v260 = vand.u32 %v259, 4294901760
    %261 = vmatpush1.msra.mxu0 %v260
    %v262 = vand.u32 %v134, 4294901760
    %v263 = vsub.f32 %v134, %v262
    %v264 = vand.u32 %v263, 4294901760
    %v265 = vsub.f32 %v263, %v264
    %v266 = vand.u32 %v265, 4294901760
    %267 = vmatprep.subr.mxu0 %v266
    %v268 = vand.u32 %v133, 4294901760
    %v269 = vsub.f32 %v133, %v268
    %v270 = vand.u32 %v269, 4294901760
    %v271 = vsub.f32 %v269, %v270
    %v272 = vand.u32 %v271, 4294901760
    %273 = vmatpush1.msra.mxu0 %v272
    %v274 = vand.u32 %v136, 4294901760
    %v275 = vsub.f32 %v136, %v274
    %v276 = vand.u32 %v275, 4294901760
    %v277 = vsub.f32 %v275, %v276
    %v278 = vand.u32 %v277, 4294901760
    %279 = vmatprep.subr.mxu0 %v278
    %v280 = vand.u32 %v135, 4294901760
    %v281 = vsub.f32 %v135, %v280
    %v282 = vand.u32 %v281, 4294901760
    %v283 = vsub.f32 %v281, %v282
    %v284 = vand.u32 %v283, 4294901760
    %285 = vmatpush1.msra.mxu0 %v284
    %286 = vmatprep.subr.mxu0 0.0
    %287 = vmatpush1.msra.mxu0 0.0
    %288 = vmatprep.subr.mxu0 0.0
    %289 = vmatpush1.msra.mxu0 0.0
    %290 = vmatprep.subr.mxu0 0.0
    %291 = vmatpush1.msra.mxu0 0.0
    %292 = vmatprep.subr.mxu0 0.0
    %293 = vmatpush1.msra.mxu0 0.0
    %294 = vmatprep.subr.mxu0 0.0
    %295 = vmatpush1.msra.mxu0 0.0
    %296 = vmatprep.subr.mxu0 0.0
    %297 = vmatpush1.msra.mxu0 0.0
    %298 = vmatprep.subr.mxu0 0.0
    %299 = vmatpush1.msra.mxu0 0.0
    %300 = vmatprep.subr.mxu0 0.0
    %301 = vmatpush1.msra.mxu0 0.0
    %302 = vmatprep.subr.mxu0 0.0
    %303 = vmatpush1.msra.mxu0 0.0
    %304 = vmatprep.subr.mxu0 0.0
    %305 = vmatpush1.msra.mxu0 0.0
    %306 = vmatprep.subr.mxu0 0.0
    %307 = vmatpush1.msra.mxu0 0.0
    %308 = vmatprep.subr.mxu0 0.0
    %309 = vmatpush1.msra.mxu0 0.0
    %310 = vmatprep.subr.mxu0 0.0
    %311 = vmatpush1.msra.mxu0 0.0
    %312 = vmatprep.subr.mxu0 0.0
    %313 = vmatpush1.msra.mxu0 0.0
    %314 = vmatprep.subr.mxu0 0.0
    %315 = vmatpush1.msra.mxu0 0.0
    %316 = vmatprep.subr.mxu0 0.0
    %317 = vmatpush1.msra.mxu0 0.0
    %318 = vmatprep.subr.mxu0 0.0
    %319 = vmatpush1.msra.mxu0 0.0
    %320 = vmatprep.subr.mxu0 0.0
    %321 = vmatpush1.msra.mxu0 0.0
    %322 = vmatprep.subr.mxu0 0.0
    %323 = vmatpush1.msra.mxu0 0.0
    %324 = vmatprep.subr.mxu0 0.0
    %325 = vmatpush1.msra.mxu0 0.0
    %326 = vmatprep.subr.mxu0 0.0
    %327 = vmatpush1.msra.mxu0 0.0
    %328 = vmatprep.subr.mxu0 0.0
    %329 = vmatpush1.msra.mxu0 0.0
    %330 = vmatprep.subr.mxu0 0.0
    %331 = vmatpush1.msra.mxu0 0.0
    %332 = vmatprep.subr.mxu0 0.0
    %333 = vmatpush1.msra.mxu0 0.0
    %334 = vmatprep.subr.mxu0 0.0
    %335 = vmatpush1.msra.mxu0 0.0
    %336 = vmatprep.subr.mxu0 0.0
    %337 = vmatpush1.msra.mxu0 0.0
    %338 = vmatprep.subr.mxu0 0.0
    %339 = vmatpush1.msra.mxu0 0.0
    %340 = vmatprep.subr.mxu0 0.0
    %341 = vmatpush1.msra.mxu0 0.0
    %342 = vmatprep.mubr.f32.mxu0 0.0
    %v343 = vand.u32 %v138, 4294901760
    %344 = vmatmul.mubr.f32.gmra.mrb[0].mxu0 %v343
    %v345 = vpop.f32.mrb[0].mxu0
    %v346 = vadd.f32 %v223, %v345
    %v347 = vpop.f32.mrb[0].mxu0
    %v348 = vadd.f32 %v225, %v347
    %349 = vmatprep.mubr.f32.mxu0 0.0
    %v350 = vand.u32 %v141, 4294901760
    %351 = vmatmul.mubr.f32.gmra.mrb[0].mxu0 %v350
    %v352 = vpop.f32.mrb[0].mxu0
    %v353 = vadd.f32 %v234, %v352
    %v354 = vpop.f32.mrb[0].mxu0
    %v355 = vadd.f32 %v236, %v354
    %356 = vdwg.mxu0
    %v357 = vand.u32 %v130, 4294901760
    %v358 = vsub.f32 %v130, %v357
    %359 = vmatprep.subr.mxu0 %v358
    %v360 = vand.u32 %v129, 4294901760
    %v361 = vsub.f32 %v129, %v360
    %362 = vmatpush1.msra.mxu0 %v361
    %v363 = vand.u32 %v132, 4294901760
    %v364 = vsub.f32 %v132, %v363
    %365 = vmatprep.subr.mxu0 %v364
    %v366 = vand.u32 %v131, 4294901760
    %v367 = vsub.f32 %v131, %v366
    %368 = vmatpush1.msra.mxu0 %v367
    %v369 = vand.u32 %v134, 4294901760
    %v370 = vsub.f32 %v134, %v369
    %371 = vmatprep.subr.mxu0 %v370
    %v372 = vand.u32 %v133, 4294901760
    %v373 = vsub.f32 %v133, %v372
    %374 = vmatpush1.msra.mxu0 %v373
    %v375 = vand.u32 %v136, 4294901760
    %v376 = vsub.f32 %v136, %v375
    %377 = vmatprep.subr.mxu0 %v376
    %v378 = vand.u32 %v135, 4294901760
    %v379 = vsub.f32 %v135, %v378
    %380 = vmatpush1.msra.mxu0 %v379
    %381 = vmatprep.subr.mxu0 0.0
    %382 = vmatpush1.msra.mxu0 0.0
    %383 = vmatprep.subr.mxu0 0.0
    %384 = vmatpush1.msra.mxu0 0.0
    %385 = vmatprep.subr.mxu0 0.0
    %386 = vmatpush1.msra.mxu0 0.0
    %387 = vmatprep.subr.mxu0 0.0
    %388 = vmatpush1.msra.mxu0 0.0
    %389 = vmatprep.subr.mxu0 0.0
    %390 = vmatpush1.msra.mxu0 0.0
    %391 = vmatprep.subr.mxu0 0.0
    %392 = vmatpush1.msra.mxu0 0.0
    %393 = vmatprep.subr.mxu0 0.0
    %394 = vmatpush1.msra.mxu0 0.0
    %395 = vmatprep.subr.mxu0 0.0
    %396 = vmatpush1.msra.mxu0 0.0
    %397 = vmatprep.subr.mxu0 0.0
    %398 = vmatpush1.msra.mxu0 0.0
    %399 = vmatprep.subr.mxu0 0.0
    %400 = vmatpush1.msra.mxu0 0.0
    %401 = vmatprep.subr.mxu0 0.0
    %402 = vmatpush1.msra.mxu0 0.0
    %403 = vmatprep.subr.mxu0 0.0
    %404 = vmatpush1.msra.mxu0 0.0
    %405 = vmatprep.subr.mxu0 0.0
    %406 = vmatpush1.msra.mxu0 0.0
    %407 = vmatprep.subr.mxu0 0.0
    %408 = vmatpush1.msra.mxu0 0.0
    %409 = vmatprep.subr.mxu0 0.0
    %410 = vmatpush1.msra.mxu0 0.0
    %411 = vmatprep.subr.mxu0 0.0
    %412 = vmatpush1.msra.mxu0 0.0
    %413 = vmatprep.subr.mxu0 0.0
    %414 = vmatpush1.msra.mxu0 0.0
    %415 = vmatprep.subr.mxu0 0.0
    %416 = vmatpush1.msra.mxu0 0.0
    %417 = vmatprep.subr.mxu0 0.0
    %418 = vmatpush1.msra.mxu0 0.0
    %419 = vmatprep.subr.mxu0 0.0
    %420 = vmatpush1.msra.mxu0 0.0
    %421 = vmatprep.subr.mxu0 0.0
    %422 = vmatpush1.msra.mxu0 0.0
    %423 = vmatprep.subr.mxu0 0.0
    %424 = vmatpush1.msra.mxu0 0.0
    %425 = vmatprep.subr.mxu0 0.0
    %426 = vmatpush1.msra.mxu0 0.0
    %427 = vmatprep.subr.mxu0 0.0
    %428 = vmatpush1.msra.mxu0 0.0
    %429 = vmatprep.subr.mxu0 0.0
    %430 = vmatpush1.msra.mxu0 0.0
    %431 = vmatprep.subr.mxu0 0.0
    %432 = vmatpush1.msra.mxu0 0.0
    %433 = vmatprep.subr.mxu0 0.0
    %434 = vmatpush1.msra.mxu0 0.0
    %435 = vmatprep.subr.mxu0 0.0
    %436 = vmatpush1.msra.mxu0 0.0
    %437 = vmatprep.mubr.f32.mxu0 0.0
    %v438 = vand.u32 %v138, 4294901760
    %v439 = vsub.f32 %v138, %v438
    %440 = vmatmul.mubr.f32.gmra.mrb[0].mxu0 %v439
    %v441 = vpop.f32.mrb[0].mxu0
    %v442 = vadd.f32 %v346, %v441
    %v443 = vpop.f32.mrb[0].mxu0
    %v444 = vadd.f32 %v348, %v443
    %445 = vmatprep.mubr.f32.mxu0 0.0
    %v446 = vand.u32 %v141, 4294901760
    %v447 = vsub.f32 %v141, %v446
    %448 = vmatmul.mubr.f32.gmra.mrb[0].mxu0 %v447
    %v449 = vpop.f32.mrb[0].mxu0
    %v450 = vadd.f32 %v353, %v449
    %v451 = vpop.f32.mrb[0].mxu0
    %v452 = vadd.f32 %v355, %v451
    %453 = vdwg.mxu0
    %v454 = vand.u32 %v130, 4294901760
    %455 = vmatprep.subr.mxu0 %v454
    %v456 = vand.u32 %v129, 4294901760
    %457 = vmatpush1.msra.mxu0 %v456
    %v458 = vand.u32 %v132, 4294901760
    %459 = vmatprep.subr.mxu0 %v458
    %v460 = vand.u32 %v131, 4294901760
    %461 = vmatpush1.msra.mxu0 %v460
    %v462 = vand.u32 %v134, 4294901760
    %463 = vmatprep.subr.mxu0 %v462
    %v464 = vand.u32 %v133, 4294901760
    %465 = vmatpush1.msra.mxu0 %v464
    %v466 = vand.u32 %v136, 4294901760
    %467 = vmatprep.subr.mxu0 %v466
    %v468 = vand.u32 %v135, 4294901760
    %469 = vmatpush1.msra.mxu0 %v468
    %470 = vmatprep.subr.mxu0 0.0
    %471 = vmatpush1.msra.mxu0 0.0
    %472 = vmatprep.subr.mxu0 0.0
    %473 = vmatpush1.msra.mxu0 0.0
    %474 = vmatprep.subr.mxu0 0.0
    %475 = vmatpush1.msra.mxu0 0.0
    %476 = vmatprep.subr.mxu0 0.0
    %477 = vmatpush1.msra.mxu0 0.0
    %478 = vmatprep.subr.mxu0 0.0
    %479 = vmatpush1.msra.mxu0 0.0
    %480 = vmatprep.subr.mxu0 0.0
    %481 = vmatpush1.msra.mxu0 0.0
    %482 = vmatprep.subr.mxu0 0.0
    %483 = vmatpush1.msra.mxu0 0.0
    %484 = vmatprep.subr.mxu0 0.0
    %485 = vmatpush1.msra.mxu0 0.0
    %486 = vmatprep.subr.mxu0 0.0
    %487 = vmatpush1.msra.mxu0 0.0
    %488 = vmatprep.subr.mxu0 0.0
    %489 = vmatpush1.msra.mxu0 0.0
    %490 = vmatprep.subr.mxu0 0.0
    %491 = vmatpush1.msra.mxu0 0.0
    %492 = vmatprep.subr.mxu0 0.0
    %493 = vmatpush1.msra.mxu0 0.0
    %494 = vmatprep.subr.mxu0 0.0
    %495 = vmatpush1.msra.mxu0 0.0
    %496 = vmatprep.subr.mxu0 0.0
    %497 = vmatpush1.msra.mxu0 0.0
    %498 = vmatprep.subr.mxu0 0.0
    %499 = vmatpush1.msra.mxu0 0.0
    %500 = vmatprep.subr.mxu0 0.0
    %501 = vmatpush1.msra.mxu0 0.0
    %502 = vmatprep.subr.mxu0 0.0
    %503 = vmatpush1.msra.mxu0 0.0
    %504 = vmatprep.subr.mxu0 0.0
    %505 = vmatpush1.msra.mxu0 0.0
    %506 = vmatprep.subr.mxu0 0.0
    %507 = vmatpush1.msra.mxu0 0.0
    %508 = vmatprep.subr.mxu0 0.0
    %509 = vmatpush1.msra.mxu0 0.0
    %510 = vmatprep.subr.mxu0 0.0
    %511 = vmatpush1.msra.mxu0 0.0
    %512 = vmatprep.subr.mxu0 0.0
    %513 = vmatpush1.msra.mxu0 0.0
    %514 = vmatprep.subr.mxu0 0.0
    %515 = vmatpush1.msra.mxu0 0.0
    %516 = vmatprep.subr.mxu0 0.0
    %517 = vmatpush1.msra.mxu0 0.0
    %518 = vmatprep.subr.mxu0 0.0
    %519 = vmatpush1.msra.mxu0 0.0
    %520 = vmatprep.subr.mxu0 0.0
    %521 = vmatpush1.msra.mxu0 0.0
    %522 = vmatprep.subr.mxu0 0.0
    %523 = vmatpush1.msra.mxu0 0.0
    %524 = vmatprep.subr.mxu0 0.0
    %525 = vmatpush1.msra.mxu0 0.0
    %526 = vmatprep.mubr.f32.mxu0 0.0
    %v527 = vand.u32 %v138, 4294901760
    %v528 = vsub.f32 %v138, %v527
    %v529 = vand.u32 %v528, 4294901760
    %530 = vmatmul.mubr.f32.gmra.mrb[0].mxu0 %v529
    %v531 = vpop.f32.mrb[0].mxu0
    %v532 = vadd.f32 %v442, %v531
    %v533 = vpop.f32.mrb[0].mxu0
    %v534 = vadd.f32 %v444, %v533
    %535 = vmatprep.mubr.f32.mxu0 0.0
    %v536 = vand.u32 %v141, 4294901760
    %v537 = vsub.f32 %v141, %v536
    %v538 = vand.u32 %v537, 4294901760
    %539 = vmatmul.mubr.f32.gmra.mrb[0].mxu0 %v538
    %v540 = vpop.f32.mrb[0].mxu0
    %v541 = vadd.f32 %v450, %v540
    %v542 = vpop.f32.mrb[0].mxu0
    %v543 = vadd.f32 %v452, %v542
    %544 = vdwg.mxu0
    %v545 = vand.u32 %v130, 4294901760
    %v546 = vsub.f32 %v130, %v545
    %v547 = vand.u32 %v546, 4294901760
    %548 = vmatprep.subr.mxu0 %v547
    %v549 = vand.u32 %v129, 4294901760
    %v550 = vsub.f32 %v129, %v549
    %v551 = vand.u32 %v550, 4294901760
    %552 = vmatpush1.msra.mxu0 %v551
    %v553 = vand.u32 %v132, 4294901760
    %v554 = vsub.f32 %v132, %v553
    %v555 = vand.u32 %v554, 4294901760
    %556 = vmatprep.subr.mxu0 %v555
    %v557 = vand.u32 %v131, 4294901760
    %v558 = vsub.f32 %v131, %v557
    %v559 = vand.u32 %v558, 4294901760
    %560 = vmatpush1.msra.mxu0 %v559
    %v561 = vand.u32 %v134, 4294901760
    %v562 = vsub.f32 %v134, %v561
    %v563 = vand.u32 %v562, 4294901760
    %564 = vmatprep.subr.mxu0 %v563
    %v565 = vand.u32 %v133, 4294901760
    %v566 = vsub.f32 %v133, %v565
    %v567 = vand.u32 %v566, 4294901760
    %568 = vmatpush1.msra.mxu0 %v567
    %v569 = vand.u32 %v136, 4294901760
    %v570 = vsub.f32 %v136, %v569
    %v571 = vand.u32 %v570, 4294901760
    %572 = vmatprep.subr.mxu0 %v571
    %v573 = vand.u32 %v135, 4294901760
    %v574 = vsub.f32 %v135, %v573
    %v575 = vand.u32 %v574, 4294901760
    %576 = vmatpush1.msra.mxu0 %v575
    %577 = vmatprep.subr.mxu0 0.0
    %578 = vmatpush1.msra.mxu0 0.0
    %579 = vmatprep.subr.mxu0 0.0
    %580 = vmatpush1.msra.mxu0 0.0
    %581 = vmatprep.subr.mxu0 0.0
    %582 = vmatpush1.msra.mxu0 0.0
    %583 = vmatprep.subr.mxu0 0.0
    %584 = vmatpush1.msra.mxu0 0.0
    %585 = vmatprep.subr.mxu0 0.0
    %586 = vmatpush1.msra.mxu0 0.0
    %587 = vmatprep.subr.mxu0 0.0
    %588 = vmatpush1.msra.mxu0 0.0
    %589 = vmatprep.subr.mxu0 0.0
    %590 = vmatpush1.msra.mxu0 0.0
    %591 = vmatprep.subr.mxu0 0.0
    %592 = vmatpush1.msra.mxu0 0.0
    %593 = vmatprep.subr.mxu0 0.0
    %594 = vmatpush1.msra.mxu0 0.0
    %595 = vmatprep.subr.mxu0 0.0
    %596 = vmatpush1.msra.mxu0 0.0
    %597 = vmatprep.subr.mxu0 0.0
    %598 = vmatpush1.msra.mxu0 0.0
    %599 = vmatprep.subr.mxu0 0.0
    %600 = vmatpush1.msra.mxu0 0.0
    %601 = vmatprep.subr.mxu0 0.0
    %602 = vmatpush1.msra.mxu0 0.0
    %603 = vmatprep.subr.mxu0 0.0
    %604 = vmatpush1.msra.mxu0 0.0
    %605 = vmatprep.subr.mxu0 0.0
    %606 = vmatpush1.msra.mxu0 0.0
    %607 = vmatprep.subr.mxu0 0.0
    %608 = vmatpush1.msra.mxu0 0.0
    %609 = vmatprep.subr.mxu0 0.0
    %610 = vmatpush1.msra.mxu0 0.0
    %611 = vmatprep.subr.mxu0 0.0
    %612 = vmatpush1.msra.mxu0 0.0
    %613 = vmatprep.subr.mxu0 0.0
    %614 = vmatpush1.msra.mxu0 0.0
    %615 = vmatprep.subr.mxu0 0.0
    %616 = vmatpush1.msra.mxu0 0.0
    %617 = vmatprep.subr.mxu0 0.0
    %618 = vmatpush1.msra.mxu0 0.0
    %619 = vmatprep.subr.mxu0 0.0
    %620 = vmatpush1.msra.mxu0 0.0
    %621 = vmatprep.subr.mxu0 0.0
    %622 = vmatpush1.msra.mxu0 0.0
    %623 = vmatprep.subr.mxu0 0.0
    %624 = vmatpush1.msra.mxu0 0.0
    %625 = vmatprep.subr.mxu0 0.0
    %626 = vmatpush1.msra.mxu0 0.0
    %627 = vmatprep.subr.mxu0 0.0
    %628 = vmatpush1.msra.mxu0 0.0
    %629 = vmatprep.subr.mxu0 0.0
    %630 = vmatpush1.msra.mxu0 0.0
    %631 = vmatprep.subr.mxu0 0.0
    %632 = vmatpush1.msra.mxu0 0.0
    %633 = vmatprep.mubr.f32.mxu0 0.0
    %v634 = vand.u32 %v138, 4294901760
    %635 = vmatmul.mubr.f32.gmra.mrb[0].mxu0 %v634
    %v636 = vpop.f32.mrb[0].mxu0
    %v637 = vadd.f32 %v532, %v636
    %v638 = vpop.f32.mrb[0].mxu0
    %v639 = vadd.f32 %v534, %v638
    %640 = vmatprep.mubr.f32.mxu0 0.0
    %v641 = vand.u32 %v141, 4294901760
    %642 = vmatmul.mubr.f32.gmra.mrb[0].mxu0 %v641
    %v643 = vpop.f32.mrb[0].mxu0
    %v644 = vadd.f32 %v541, %v643
    %v645 = vpop.f32.mrb[0].mxu0
    %v646 = vadd.f32 %v543, %v645
    %647 = vdwg.mxu0
    %v648 = vand.u32 %v130, 4294901760
    %649 = vmatprep.subr.mxu0 %v648
    %v650 = vand.u32 %v129, 4294901760
    %651 = vmatpush1.msra.mxu0 %v650
    %v652 = vand.u32 %v132, 4294901760
    %653 = vmatprep.subr.mxu0 %v652
    %v654 = vand.u32 %v131, 4294901760
    %655 = vmatpush1.msra.mxu0 %v654
    %v656 = vand.u32 %v134, 4294901760
    %657 = vmatprep.subr.mxu0 %v656
    %v658 = vand.u32 %v133, 4294901760
    %659 = vmatpush1.msra.mxu0 %v658
    %v660 = vand.u32 %v136, 4294901760
    %661 = vmatprep.subr.mxu0 %v660
    %v662 = vand.u32 %v135, 4294901760
    %663 = vmatpush1.msra.mxu0 %v662
    %664 = vmatprep.subr.mxu0 0.0
    %665 = vmatpush1.msra.mxu0 0.0
    %666 = vmatprep.subr.mxu0 0.0
    %667 = vmatpush1.msra.mxu0 0.0
    %668 = vmatprep.subr.mxu0 0.0
    %669 = vmatpush1.msra.mxu0 0.0
    %670 = vmatprep.subr.mxu0 0.0
    %671 = vmatpush1.msra.mxu0 0.0
    %672 = vmatprep.subr.mxu0 0.0
    %673 = vmatpush1.msra.mxu0 0.0
    %674 = vmatprep.subr.mxu0 0.0
    %675 = vmatpush1.msra.mxu0 0.0
    %676 = vmatprep.subr.mxu0 0.0
    %677 = vmatpush1.msra.mxu0 0.0
    %678 = vmatprep.subr.mxu0 0.0
    %679 = vmatpush1.msra.mxu0 0.0
    %680 = vmatprep.subr.mxu0 0.0
    %681 = vmatpush1.msra.mxu0 0.0
    %682 = vmatprep.subr.mxu0 0.0
    %683 = vmatpush1.msra.mxu0 0.0
    %684 = vmatprep.subr.mxu0 0.0
    %685 = vmatpush1.msra.mxu0 0.0
    %686 = vmatprep.subr.mxu0 0.0
    %687 = vmatpush1.msra.mxu0 0.0
    %688 = vmatprep.subr.mxu0 0.0
    %689 = vmatpush1.msra.mxu0 0.0
    %690 = vmatprep.subr.mxu0 0.0
    %691 = vmatpush1.msra.mxu0 0.0
    %692 = vmatprep.subr.mxu0 0.0
    %693 = vmatpush1.msra.mxu0 0.0
    %694 = vmatprep.subr.mxu0 0.0
    %695 = vmatpush1.msra.mxu0 0.0
    %696 = vmatprep.subr.mxu0 0.0
    %697 = vmatpush1.msra.mxu0 0.0
    %698 = vmatprep.subr.mxu0 0.0
    %699 = vmatpush1.msra.mxu0 0.0
    %700 = vmatprep.subr.mxu0 0.0
    %701 = vmatpush1.msra.mxu0 0.0
    %702 = vmatprep.subr.mxu0 0.0
    %703 = vmatpush1.msra.mxu0 0.0
    %704 = vmatprep.subr.mxu0 0.0
    %705 = vmatpush1.msra.mxu0 0.0
    %706 = vmatprep.subr.mxu0 0.0
    %707 = vmatpush1.msra.mxu0 0.0
    %708 = vmatprep.subr.mxu0 0.0
    %709 = vmatpush1.msra.mxu0 0.0
    %710 = vmatprep.subr.mxu0 0.0
    %711 = vmatpush1.msra.mxu0 0.0
    %712 = vmatprep.subr.mxu0 0.0
    %713 = vmatpush1.msra.mxu0 0.0
    %714 = vmatprep.subr.mxu0 0.0
    %715 = vmatpush1.msra.mxu0 0.0
    %716 = vmatprep.subr.mxu0 0.0
    %717 = vmatpush1.msra.mxu0 0.0
    %718 = vmatprep.subr.mxu0 0.0
    %719 = vmatpush1.msra.mxu0 0.0
    %720 = vmatprep.mubr.f32.mxu0 0.0
    %v721 = vand.u32 %v138, 4294901760
    %722 = vmatmul.mubr.f32.gmra.mrb[0].mxu0 %v721
    %v723 = vpop.f32.mrb[0].mxu0
    %v724 = vadd.f32 %v637, %v723
    %v725 = vpop.f32.mrb[0].mxu0
    %v726 = vadd.f32 %v639, %v725
    %727 = vmatprep.mubr.f32.mxu0 0.0
    %v728 = vand.u32 %v141, 4294901760
    %729 = vmatmul.mubr.f32.gmra.mrb[0].mxu0 %v728
    %v730 = vpop.f32.mrb[0].mxu0
    %v731 = vadd.f32 %v644, %v730
    %v732 = vpop.f32.mrb[0].mxu0
    %v733 = vadd.f32 %v646, %v732
    %734 = vdwg.mxu0
    %v736 = vsel %vm72, %v126, 0
    %v739 = vsel %vm72, %v128, 0
    %v741 = vand.u32 %v130, 4294901760
    %742 = vmatprep.subr.mxu0 %v741
    %v743 = vand.u32 %v129, 4294901760
    %744 = vmatpush1.msra.mxu0 %v743
    %v745 = vand.u32 %v132, 4294901760
    %746 = vmatprep.subr.mxu0 %v745
    %v747 = vand.u32 %v131, 4294901760
    %748 = vmatpush1.msra.mxu0 %v747
    %v749 = vand.u32 %v134, 4294901760
    %750 = vmatprep.subr.mxu0 %v749
    %v751 = vand.u32 %v133, 4294901760
    %752 = vmatpush1.msra.mxu0 %v751
    %v753 = vand.u32 %v136, 4294901760
    %754 = vmatprep.subr.mxu0 %v753
    %v755 = vand.u32 %v135, 4294901760
    %756 = vmatpush1.msra.mxu0 %v755
    %757 = vmatprep.subr.mxu0 0.0
    %758 = vmatpush1.msra.mxu0 0.0
    %759 = vmatprep.subr.mxu0 0.0
    %760 = vmatpush1.msra.mxu0 0.0
    %761 = vmatprep.subr.mxu0 0.0
    %762 = vmatpush1.msra.mxu0 0.0
    %763 = vmatprep.subr.mxu0 0.0
    %764 = vmatpush1.msra.mxu0 0.0
    %765 = vmatprep.subr.mxu0 0.0
    %766 = vmatpush1.msra.mxu0 0.0
    %767 = vmatprep.subr.mxu0 0.0
    %768 = vmatpush1.msra.mxu0 0.0
    %769 = vmatprep.subr.mxu0 0.0
    %770 = vmatpush1.msra.mxu0 0.0
    %771 = vmatprep.subr.mxu0 0.0
    %772 = vmatpush1.msra.mxu0 0.0
    %773 = vmatprep.subr.mxu0 0.0
    %774 = vmatpush1.msra.mxu0 0.0
    %775 = vmatprep.subr.mxu0 0.0
    %776 = vmatpush1.msra.mxu0 0.0
    %777 = vmatprep.subr.mxu0 0.0
    %778 = vmatpush1.msra.mxu0 0.0
    %779 = vmatprep.subr.mxu0 0.0
    %780 = vmatpush1.msra.mxu0 0.0
    %781 = vmatprep.subr.mxu0 0.0
    %782 = vmatpush1.msra.mxu0 0.0
    %783 = vmatprep.subr.mxu0 0.0
    %784 = vmatpush1.msra.mxu0 0.0
    %785 = vmatprep.subr.mxu0 0.0
    %786 = vmatpush1.msra.mxu0 0.0
    %787 = vmatprep.subr.mxu0 0.0
    %788 = vmatpush1.msra.mxu0 0.0
    %789 = vmatprep.subr.mxu0 0.0
    %790 = vmatpush1.msra.mxu0 0.0
    %791 = vmatprep.subr.mxu0 0.0
    %792 = vmatpush1.msra.mxu0 0.0
    %793 = vmatprep.subr.mxu0 0.0
    %794 = vmatpush1.msra.mxu0 0.0
    %795 = vmatprep.subr.mxu0 0.0
    %796 = vmatpush1.msra.mxu0 0.0
    %797 = vmatprep.subr.mxu0 0.0
    %798 = vmatpush1.msra.mxu0 0.0
    %799 = vmatprep.subr.mxu0 0.0
    %800 = vmatpush1.msra.mxu0 0.0
    %801 = vmatprep.subr.mxu0 0.0
    %802 = vmatpush1.msra.mxu0 0.0
    %803 = vmatprep.subr.mxu0 0.0
    %804 = vmatpush1.msra.mxu0 0.0
    %805 = vmatprep.subr.mxu0 0.0
    %806 = vmatpush1.msra.mxu0 0.0
    %807 = vmatprep.subr.mxu0 0.0
    %808 = vmatpush1.msra.mxu0 0.0
    %809 = vmatprep.subr.mxu0 0.0
    %810 = vmatpush1.msra.mxu0 0.0
    %811 = vmatprep.subr.mxu0 0.0
    %812 = vmatpush1.msra.mxu0 0.0
    %813 = vmatprep.mubr.f32.mxu0 0.0
    %v814 = vand.u32 %v736, 4294901760
    %v815 = vsub.f32 %v736, %v814
    %v816 = vand.u32 %v815, 4294901760
    %v817 = vsub.f32 %v815, %v816
    %v818 = vand.u32 %v817, 4294901760
    %819 = vmatmul.mubr.f32.gmra.mrb[0].mxu0 %v818
    %v820 = vpop.f32.mrb[0].mxu0
    %v821 = vadd.f32 0.0, %v820
    %v822 = vpop.f32.mrb[0].mxu0
    %v823 = vadd.f32 0.0, %v822
    %824 = vmatprep.mubr.f32.mxu0 0.0
    %v825 = vand.u32 %v739, 4294901760
    %v826 = vsub.f32 %v739, %v825
    %v827 = vand.u32 %v826, 4294901760
    %v828 = vsub.f32 %v826, %v827
    %v829 = vand.u32 %v828, 4294901760
    %830 = vmatmul.mubr.f32.gmra.mrb[0].mxu0 %v829
    %v831 = vpop.f32.mrb[0].mxu0
    %v832 = vadd.f32 0.0, %v831
    %v833 = vpop.f32.mrb[0].mxu0
    %v834 = vadd.f32 0.0, %v833
    %835 = vdwg.mxu0
    %v836 = vand.u32 %v130, 4294901760
    %v837 = vsub.f32 %v130, %v836
    %v838 = vand.u32 %v837, 4294901760
    %v839 = vsub.f32 %v837, %v838
    %v840 = vand.u32 %v839, 4294901760
    %841 = vmatprep.subr.mxu0 %v840
    %v842 = vand.u32 %v129, 4294901760
    %v843 = vsub.f32 %v129, %v842
    %v844 = vand.u32 %v843, 4294901760
    %v845 = vsub.f32 %v843, %v844
    %v846 = vand.u32 %v845, 4294901760
    %847 = vmatpush1.msra.mxu0 %v846
    %v848 = vand.u32 %v132, 4294901760
    %v849 = vsub.f32 %v132, %v848
    %v850 = vand.u32 %v849, 4294901760
    %v851 = vsub.f32 %v849, %v850
    %v852 = vand.u32 %v851, 4294901760
    %853 = vmatprep.subr.mxu0 %v852
    %v854 = vand.u32 %v131, 4294901760
    %v855 = vsub.f32 %v131, %v854
    %v856 = vand.u32 %v855, 4294901760
    %v857 = vsub.f32 %v855, %v856
    %v858 = vand.u32 %v857, 4294901760
    %859 = vmatpush1.msra.mxu0 %v858
    %v860 = vand.u32 %v134, 4294901760
    %v861 = vsub.f32 %v134, %v860
    %v862 = vand.u32 %v861, 4294901760
    %v863 = vsub.f32 %v861, %v862
    %v864 = vand.u32 %v863, 4294901760
    %865 = vmatprep.subr.mxu0 %v864
    %v866 = vand.u32 %v133, 4294901760
    %v867 = vsub.f32 %v133, %v866
    %v868 = vand.u32 %v867, 4294901760
    %v869 = vsub.f32 %v867, %v868
    %v870 = vand.u32 %v869, 4294901760
    %871 = vmatpush1.msra.mxu0 %v870
    %v872 = vand.u32 %v136, 4294901760
    %v873 = vsub.f32 %v136, %v872
    %v874 = vand.u32 %v873, 4294901760
    %v875 = vsub.f32 %v873, %v874
    %v876 = vand.u32 %v875, 4294901760
    %877 = vmatprep.subr.mxu0 %v876
    %v878 = vand.u32 %v135, 4294901760
    %v879 = vsub.f32 %v135, %v878
    %v880 = vand.u32 %v879, 4294901760
    %v881 = vsub.f32 %v879, %v880
    %v882 = vand.u32 %v881, 4294901760
    %883 = vmatpush1.msra.mxu0 %v882
    %884 = vmatprep.subr.mxu0 0.0
    %885 = vmatpush1.msra.mxu0 0.0
    %886 = vmatprep.subr.mxu0 0.0
    %887 = vmatpush1.msra.mxu0 0.0
    %888 = vmatprep.subr.mxu0 0.0
    %889 = vmatpush1.msra.mxu0 0.0
    %890 = vmatprep.subr.mxu0 0.0
    %891 = vmatpush1.msra.mxu0 0.0
    %892 = vmatprep.subr.mxu0 0.0
    %893 = vmatpush1.msra.mxu0 0.0
    %894 = vmatprep.subr.mxu0 0.0
    %895 = vmatpush1.msra.mxu0 0.0
    %896 = vmatprep.subr.mxu0 0.0
    %897 = vmatpush1.msra.mxu0 0.0
    %898 = vmatprep.subr.mxu0 0.0
    %899 = vmatpush1.msra.mxu0 0.0
    %900 = vmatprep.subr.mxu0 0.0
    %901 = vmatpush1.msra.mxu0 0.0
    %902 = vmatprep.subr.mxu0 0.0
    %903 = vmatpush1.msra.mxu0 0.0
    %904 = vmatprep.subr.mxu0 0.0
    %905 = vmatpush1.msra.mxu0 0.0
    %906 = vmatprep.subr.mxu0 0.0
    %907 = vmatpush1.msra.mxu0 0.0
    %908 = vmatprep.subr.mxu0 0.0
    %909 = vmatpush1.msra.mxu0 0.0
    %910 = vmatprep.subr.mxu0 0.0
    %911 = vmatpush1.msra.mxu0 0.0
    %912 = vmatprep.subr.mxu0 0.0
    %913 = vmatpush1.msra.mxu0 0.0
    %914 = vmatprep.subr.mxu0 0.0
    %915 = vmatpush1.msra.mxu0 0.0
    %916 = vmatprep.subr.mxu0 0.0
    %917 = vmatpush1.msra.mxu0 0.0
    %918 = vmatprep.subr.mxu0 0.0
    %919 = vmatpush1.msra.mxu0 0.0
    %920 = vmatprep.subr.mxu0 0.0
    %921 = vmatpush1.msra.mxu0 0.0
    %922 = vmatprep.subr.mxu0 0.0
    %923 = vmatpush1.msra.mxu0 0.0
    %924 = vmatprep.subr.mxu0 0.0
    %925 = vmatpush1.msra.mxu0 0.0
    %926 = vmatprep.subr.mxu0 0.0
    %927 = vmatpush1.msra.mxu0 0.0
    %928 = vmatprep.subr.mxu0 0.0
    %929 = vmatpush1.msra.mxu0 0.0
    %930 = vmatprep.subr.mxu0 0.0
    %931 = vmatpush1.msra.mxu0 0.0
    %932 = vmatprep.subr.mxu0 0.0
    %933 = vmatpush1.msra.mxu0 0.0
    %934 = vmatprep.subr.mxu0 0.0
    %935 = vmatpush1.msra.mxu0 0.0
    %936 = vmatprep.subr.mxu0 0.0
    %937 = vmatpush1.msra.mxu0 0.0
    %938 = vmatprep.subr.mxu0 0.0
    %939 = vmatpush1.msra.mxu0 0.0
    %940 = vmatprep.mubr.f32.mxu0 0.0
    %v941 = vand.u32 %v736, 4294901760
    %942 = vmatmul.mubr.f32.gmra.mrb[0].mxu0 %v941
    %v943 = vpop.f32.mrb[0].mxu0
    %v944 = vadd.f32 %v821, %v943
    %v945 = vpop.f32.mrb[0].mxu0
    %v946 = vadd.f32 %v823, %v945
    %947 = vmatprep.mubr.f32.mxu0 0.0
    %v948 = vand.u32 %v739, 4294901760
    %949 = vmatmul.mubr.f32.gmra.mrb[0].mxu0 %v948
    %v950 = vpop.f32.mrb[0].mxu0
    %v951 = vadd.f32 %v832, %v950
    %v952 = vpop.f32.mrb[0].mxu0
    %v953 = vadd.f32 %v834, %v952
    %954 = vdwg.mxu0
    %v955 = vand.u32 %v130, 4294901760
    %v956 = vsub.f32 %v130, %v955
    %957 = vmatprep.subr.mxu0 %v956
    %v958 = vand.u32 %v129, 4294901760
    %v959 = vsub.f32 %v129, %v958
    %960 = vmatpush1.msra.mxu0 %v959
    %v961 = vand.u32 %v132, 4294901760
    %v962 = vsub.f32 %v132, %v961
    %963 = vmatprep.subr.mxu0 %v962
    %v964 = vand.u32 %v131, 4294901760
    %v965 = vsub.f32 %v131, %v964
    %966 = vmatpush1.msra.mxu0 %v965
    %v967 = vand.u32 %v134, 4294901760
    %v968 = vsub.f32 %v134, %v967
    %969 = vmatprep.subr.mxu0 %v968
    %v970 = vand.u32 %v133, 4294901760
    %v971 = vsub.f32 %v133, %v970
    %972 = vmatpush1.msra.mxu0 %v971
    %v973 = vand.u32 %v136, 4294901760
    %v974 = vsub.f32 %v136, %v973
    %975 = vmatprep.subr.mxu0 %v974
    %v976 = vand.u32 %v135, 4294901760
    %v977 = vsub.f32 %v135, %v976
    %978 = vmatpush1.msra.mxu0 %v977
    %979 = vmatprep.subr.mxu0 0.0
    %980 = vmatpush1.msra.mxu0 0.0
    %981 = vmatprep.subr.mxu0 0.0
    %982 = vmatpush1.msra.mxu0 0.0
    %983 = vmatprep.subr.mxu0 0.0
    %984 = vmatpush1.msra.mxu0 0.0
    %985 = vmatprep.subr.mxu0 0.0
    %986 = vmatpush1.msra.mxu0 0.0
    %987 = vmatprep.subr.mxu0 0.0
    %988 = vmatpush1.msra.mxu0 0.0
    %989 = vmatprep.subr.mxu0 0.0
    %990 = vmatpush1.msra.mxu0 0.0
    %991 = vmatprep.subr.mxu0 0.0
    %992 = vmatpush1.msra.mxu0 0.0
    %993 = vmatprep.subr.mxu0 0.0
    %994 = vmatpush1.msra.mxu0 0.0
    %995 = vmatprep.subr.mxu0 0.0
    %996 = vmatpush1.msra.mxu0 0.0
    %997 = vmatprep.subr.mxu0 0.0
    %998 = vmatpush1.msra.mxu0 0.0
    %999 = vmatprep.subr.mxu0 0.0
    %1000 = vmatpush1.msra.mxu0 0.0
    %1001 = vmatprep.subr.mxu0 0.0
    %1002 = vmatpush1.msra.mxu0 0.0
    %1003 = vmatprep.subr.mxu0 0.0
    %1004 = vmatpush1.msra.mxu0 0.0
    %1005 = vmatprep.subr.mxu0 0.0
    %1006 = vmatpush1.msra.mxu0 0.0
    %1007 = vmatprep.subr.mxu0 0.0
    %1008 = vmatpush1.msra.mxu0 0.0
    %1009 = vmatprep.subr.mxu0 0.0
    %1010 = vmatpush1.msra.mxu0 0.0
    %1011 = vmatprep.subr.mxu0 0.0
    %1012 = vmatpush1.msra.mxu0 0.0
    %1013 = vmatprep.subr.mxu0 0.0
    %1014 = vmatpush1.msra.mxu0 0.0
    %1015 = vmatprep.subr.mxu0 0.0
    %1016 = vmatpush1.msra.mxu0 0.0
    %1017 = vmatprep.subr.mxu0 0.0
    %1018 = vmatpush1.msra.mxu0 0.0
    %1019 = vmatprep.subr.mxu0 0.0
    %1020 = vmatpush1.msra.mxu0 0.0
    %1021 = vmatprep.subr.mxu0 0.0
    %1022 = vmatpush1.msra.mxu0 0.0
    %1023 = vmatprep.subr.mxu0 0.0
    %1024 = vmatpush1.msra.mxu0 0.0
    %1025 = vmatprep.subr.mxu0 0.0
    %1026 = vmatpush1.msra.mxu0 0.0
    %1027 = vmatprep.subr.mxu0 0.0
    %1028 = vmatpush1.msra.mxu0 0.0
    %1029 = vmatprep.subr.mxu0 0.0
    %1030 = vmatpush1.msra.mxu0 0.0
    %1031 = vmatprep.subr.mxu0 0.0
    %1032 = vmatpush1.msra.mxu0 0.0
    %1033 = vmatprep.subr.mxu0 0.0
    %1034 = vmatpush1.msra.mxu0 0.0
    %1035 = vmatprep.mubr.f32.mxu0 0.0
    %v1036 = vand.u32 %v736, 4294901760
    %v1037 = vsub.f32 %v736, %v1036
    %1038 = vmatmul.mubr.f32.gmra.mrb[0].mxu0 %v1037
    %v1039 = vpop.f32.mrb[0].mxu0
    %v1040 = vadd.f32 %v944, %v1039
    %v1041 = vpop.f32.mrb[0].mxu0
    %v1042 = vadd.f32 %v946, %v1041
    %1043 = vmatprep.mubr.f32.mxu0 0.0
    %v1044 = vand.u32 %v739, 4294901760
    %v1045 = vsub.f32 %v739, %v1044
    %1046 = vmatmul.mubr.f32.gmra.mrb[0].mxu0 %v1045
    %v1047 = vpop.f32.mrb[0].mxu0
    %v1048 = vadd.f32 %v951, %v1047
    %v1049 = vpop.f32.mrb[0].mxu0
    %v1050 = vadd.f32 %v953, %v1049
    %1051 = vdwg.mxu0
    %v1052 = vand.u32 %v130, 4294901760
    %1053 = vmatprep.subr.mxu0 %v1052
    %v1054 = vand.u32 %v129, 4294901760
    %1055 = vmatpush1.msra.mxu0 %v1054
    %v1056 = vand.u32 %v132, 4294901760
    %1057 = vmatprep.subr.mxu0 %v1056
    %v1058 = vand.u32 %v131, 4294901760
    %1059 = vmatpush1.msra.mxu0 %v1058
    %v1060 = vand.u32 %v134, 4294901760
    %1061 = vmatprep.subr.mxu0 %v1060
    %v1062 = vand.u32 %v133, 4294901760
    %1063 = vmatpush1.msra.mxu0 %v1062
    %v1064 = vand.u32 %v136, 4294901760
    %1065 = vmatprep.subr.mxu0 %v1064
    %v1066 = vand.u32 %v135, 4294901760
    %1067 = vmatpush1.msra.mxu0 %v1066
    %1068 = vmatprep.subr.mxu0 0.0
    %1069 = vmatpush1.msra.mxu0 0.0
    %1070 = vmatprep.subr.mxu0 0.0
    %1071 = vmatpush1.msra.mxu0 0.0
    %1072 = vmatprep.subr.mxu0 0.0
    %1073 = vmatpush1.msra.mxu0 0.0
    %1074 = vmatprep.subr.mxu0 0.0
    %1075 = vmatpush1.msra.mxu0 0.0
    %1076 = vmatprep.subr.mxu0 0.0
    %1077 = vmatpush1.msra.mxu0 0.0
    %1078 = vmatprep.subr.mxu0 0.0
    %1079 = vmatpush1.msra.mxu0 0.0
    %1080 = vmatprep.subr.mxu0 0.0
    %1081 = vmatpush1.msra.mxu0 0.0
    %1082 = vmatprep.subr.mxu0 0.0
    %1083 = vmatpush1.msra.mxu0 0.0
    %1084 = vmatprep.subr.mxu0 0.0
    %1085 = vmatpush1.msra.mxu0 0.0
    %1086 = vmatprep.subr.mxu0 0.0
    %1087 = vmatpush1.msra.mxu0 0.0
    %1088 = vmatprep.subr.mxu0 0.0
    %1089 = vmatpush1.msra.mxu0 0.0
    %1090 = vmatprep.subr.mxu0 0.0
    %1091 = vmatpush1.msra.mxu0 0.0
    %1092 = vmatprep.subr.mxu0 0.0
    %1093 = vmatpush1.msra.mxu0 0.0
    %1094 = vmatprep.subr.mxu0 0.0
    %1095 = vmatpush1.msra.mxu0 0.0
    %1096 = vmatprep.subr.mxu0 0.0
    %1097 = vmatpush1.msra.mxu0 0.0
    %1098 = vmatprep.subr.mxu0 0.0
    %1099 = vmatpush1.msra.mxu0 0.0
    %1100 = vmatprep.subr.mxu0 0.0
    %1101 = vmatpush1.msra.mxu0 0.0
    %1102 = vmatprep.subr.mxu0 0.0
    %1103 = vmatpush1.msra.mxu0 0.0
    %1104 = vmatprep.subr.mxu0 0.0
    %1105 = vmatpush1.msra.mxu0 0.0
    %1106 = vmatprep.subr.mxu0 0.0
    %1107 = vmatpush1.msra.mxu0 0.0
    %1108 = vmatprep.subr.mxu0 0.0
    %1109 = vmatpush1.msra.mxu0 0.0
    %1110 = vmatprep.subr.mxu0 0.0
    %1111 = vmatpush1.msra.mxu0 0.0
    %1112 = vmatprep.subr.mxu0 0.0
    %1113 = vmatpush1.msra.mxu0 0.0
    %1114 = vmatprep.subr.mxu0 0.0
    %1115 = vmatpush1.msra.mxu0 0.0
    %1116 = vmatprep.subr.mxu0 0.0
    %1117 = vmatpush1.msra.mxu0 0.0
    %1118 = vmatprep.subr.mxu0 0.0
    %1119 = vmatpush1.msra.mxu0 0.0
    %1120 = vmatprep.subr.mxu0 0.0
    %1121 = vmatpush1.msra.mxu0 0.0
    %1122 = vmatprep.subr.mxu0 0.0
    %1123 = vmatpush1.msra.mxu0 0.0
    %1124 = vmatprep.mubr.f32.mxu0 0.0
    %v1125 = vand.u32 %v736, 4294901760
    %v1126 = vsub.f32 %v736, %v1125
    %v1127 = vand.u32 %v1126, 4294901760
    %1128 = vmatmul.mubr.f32.gmra.mrb[0].mxu0 %v1127
    %v1129 = vpop.f32.mrb[0].mxu0
    %v1130 = vadd.f32 %v1040, %v1129
    %v1131 = vpop.f32.mrb[0].mxu0
    %v1132 = vadd.f32 %v1042, %v1131
    %1133 = vmatprep.mubr.f32.mxu0 0.0
    %v1134 = vand.u32 %v739, 4294901760
    %v1135 = vsub.f32 %v739, %v1134
    %v1136 = vand.u32 %v1135, 4294901760
    %1137 = vmatmul.mubr.f32.gmra.mrb[0].mxu0 %v1136
    %v1138 = vpop.f32.mrb[0].mxu0
    %v1139 = vadd.f32 %v1048, %v1138
    %v1140 = vpop.f32.mrb[0].mxu0
    %v1141 = vadd.f32 %v1050, %v1140
    %1142 = vdwg.mxu0
    %v1143 = vand.u32 %v130, 4294901760
    %v1144 = vsub.f32 %v130, %v1143
    %v1145 = vand.u32 %v1144, 4294901760
    %1146 = vmatprep.subr.mxu0 %v1145
    %v1147 = vand.u32 %v129, 4294901760
    %v1148 = vsub.f32 %v129, %v1147
    %v1149 = vand.u32 %v1148, 4294901760
    %1150 = vmatpush1.msra.mxu0 %v1149
    %v1151 = vand.u32 %v132, 4294901760
    %v1152 = vsub.f32 %v132, %v1151
    %v1153 = vand.u32 %v1152, 4294901760
    %1154 = vmatprep.subr.mxu0 %v1153
    %v1155 = vand.u32 %v131, 4294901760
    %v1156 = vsub.f32 %v131, %v1155
    %v1157 = vand.u32 %v1156, 4294901760
    %1158 = vmatpush1.msra.mxu0 %v1157
    %v1159 = vand.u32 %v134, 4294901760
    %v1160 = vsub.f32 %v134, %v1159
    %v1161 = vand.u32 %v1160, 4294901760
    %1162 = vmatprep.subr.mxu0 %v1161
    %v1163 = vand.u32 %v133, 4294901760
    %v1164 = vsub.f32 %v133, %v1163
    %v1165 = vand.u32 %v1164, 4294901760
    %1166 = vmatpush1.msra.mxu0 %v1165
    %v1167 = vand.u32 %v136, 4294901760
    %v1168 = vsub.f32 %v136, %v1167
    %v1169 = vand.u32 %v1168, 4294901760
    %1170 = vmatprep.subr.mxu0 %v1169
    %v1171 = vand.u32 %v135, 4294901760
    %v1172 = vsub.f32 %v135, %v1171
    %v1173 = vand.u32 %v1172, 4294901760
    %1174 = vmatpush1.msra.mxu0 %v1173
    %1175 = vmatprep.subr.mxu0 0.0
    %1176 = vmatpush1.msra.mxu0 0.0
    %1177 = vmatprep.subr.mxu0 0.0
    %1178 = vmatpush1.msra.mxu0 0.0
    %1179 = vmatprep.subr.mxu0 0.0
    %1180 = vmatpush1.msra.mxu0 0.0
    %1181 = vmatprep.subr.mxu0 0.0
    %1182 = vmatpush1.msra.mxu0 0.0
    %1183 = vmatprep.subr.mxu0 0.0
    %1184 = vmatpush1.msra.mxu0 0.0
    %1185 = vmatprep.subr.mxu0 0.0
    %1186 = vmatpush1.msra.mxu0 0.0
    %1187 = vmatprep.subr.mxu0 0.0
    %1188 = vmatpush1.msra.mxu0 0.0
    %1189 = vmatprep.subr.mxu0 0.0
    %1190 = vmatpush1.msra.mxu0 0.0
    %1191 = vmatprep.subr.mxu0 0.0
    %1192 = vmatpush1.msra.mxu0 0.0
    %1193 = vmatprep.subr.mxu0 0.0
    %1194 = vmatpush1.msra.mxu0 0.0
    %1195 = vmatprep.subr.mxu0 0.0
    %1196 = vmatpush1.msra.mxu0 0.0
    %1197 = vmatprep.subr.mxu0 0.0
    %1198 = vmatpush1.msra.mxu0 0.0
    %1199 = vmatprep.subr.mxu0 0.0
    %1200 = vmatpush1.msra.mxu0 0.0
    %1201 = vmatprep.subr.mxu0 0.0
    %1202 = vmatpush1.msra.mxu0 0.0
    %1203 = vmatprep.subr.mxu0 0.0
    %1204 = vmatpush1.msra.mxu0 0.0
    %1205 = vmatprep.subr.mxu0 0.0
    %1206 = vmatpush1.msra.mxu0 0.0
    %1207 = vmatprep.subr.mxu0 0.0
    %1208 = vmatpush1.msra.mxu0 0.0
    %1209 = vmatprep.subr.mxu0 0.0
    %1210 = vmatpush1.msra.mxu0 0.0
    %1211 = vmatprep.subr.mxu0 0.0
    %1212 = vmatpush1.msra.mxu0 0.0
    %1213 = vmatprep.subr.mxu0 0.0
    %1214 = vmatpush1.msra.mxu0 0.0
    %1215 = vmatprep.subr.mxu0 0.0
    %1216 = vmatpush1.msra.mxu0 0.0
    %1217 = vmatprep.subr.mxu0 0.0
    %1218 = vmatpush1.msra.mxu0 0.0
    %1219 = vmatprep.subr.mxu0 0.0
    %1220 = vmatpush1.msra.mxu0 0.0
    %1221 = vmatprep.subr.mxu0 0.0
    %1222 = vmatpush1.msra.mxu0 0.0
    %1223 = vmatprep.subr.mxu0 0.0
    %1224 = vmatpush1.msra.mxu0 0.0
    %1225 = vmatprep.subr.mxu0 0.0
    %1226 = vmatpush1.msra.mxu0 0.0
    %1227 = vmatprep.subr.mxu0 0.0
    %1228 = vmatpush1.msra.mxu0 0.0
    %1229 = vmatprep.subr.mxu0 0.0
    %1230 = vmatpush1.msra.mxu0 0.0
    %1231 = vmatprep.mubr.f32.mxu0 0.0
    %v1232 = vand.u32 %v736, 4294901760
    %1233 = vmatmul.mubr.f32.gmra.mrb[0].mxu0 %v1232
    %v1234 = vpop.f32.mrb[0].mxu0
    %v1235 = vadd.f32 %v1130, %v1234
    %v1236 = vpop.f32.mrb[0].mxu0
    %v1237 = vadd.f32 %v1132, %v1236
    %1238 = vmatprep.mubr.f32.mxu0 0.0
    %v1239 = vand.u32 %v739, 4294901760
    %1240 = vmatmul.mubr.f32.gmra.mrb[0].mxu0 %v1239
    %v1241 = vpop.f32.mrb[0].mxu0
    %v1242 = vadd.f32 %v1139, %v1241
    %v1243 = vpop.f32.mrb[0].mxu0
    %v1244 = vadd.f32 %v1141, %v1243
    %1245 = vdwg.mxu0
    %v1246 = vand.u32 %v130, 4294901760
    %1247 = vmatprep.subr.mxu0 %v1246
    %v1248 = vand.u32 %v129, 4294901760
    %1249 = vmatpush1.msra.mxu0 %v1248
    %v1250 = vand.u32 %v132, 4294901760
    %1251 = vmatprep.subr.mxu0 %v1250
    %v1252 = vand.u32 %v131, 4294901760
    %1253 = vmatpush1.msra.mxu0 %v1252
    %v1254 = vand.u32 %v134, 4294901760
    %1255 = vmatprep.subr.mxu0 %v1254
    %v1256 = vand.u32 %v133, 4294901760
    %1257 = vmatpush1.msra.mxu0 %v1256
    %v1258 = vand.u32 %v136, 4294901760
    %1259 = vmatprep.subr.mxu0 %v1258
    %v1260 = vand.u32 %v135, 4294901760
    %1261 = vmatpush1.msra.mxu0 %v1260
    %1262 = vmatprep.subr.mxu0 0.0
    %1263 = vmatpush1.msra.mxu0 0.0
    %1264 = vmatprep.subr.mxu0 0.0
    %1265 = vmatpush1.msra.mxu0 0.0
    %1266 = vmatprep.subr.mxu0 0.0
    %1267 = vmatpush1.msra.mxu0 0.0
    %1268 = vmatprep.subr.mxu0 0.0
    %1269 = vmatpush1.msra.mxu0 0.0
    %1270 = vmatprep.subr.mxu0 0.0
    %1271 = vmatpush1.msra.mxu0 0.0
    %1272 = vmatprep.subr.mxu0 0.0
    %1273 = vmatpush1.msra.mxu0 0.0
    %1274 = vmatprep.subr.mxu0 0.0
    %1275 = vmatpush1.msra.mxu0 0.0
    %1276 = vmatprep.subr.mxu0 0.0
    %1277 = vmatpush1.msra.mxu0 0.0
    %1278 = vmatprep.subr.mxu0 0.0
    %1279 = vmatpush1.msra.mxu0 0.0
    %1280 = vmatprep.subr.mxu0 0.0
    %1281 = vmatpush1.msra.mxu0 0.0
    %1282 = vmatprep.subr.mxu0 0.0
    %1283 = vmatpush1.msra.mxu0 0.0
    %1284 = vmatprep.subr.mxu0 0.0
    %1285 = vmatpush1.msra.mxu0 0.0
    %1286 = vmatprep.subr.mxu0 0.0
    %1287 = vmatpush1.msra.mxu0 0.0
    %1288 = vmatprep.subr.mxu0 0.0
    %1289 = vmatpush1.msra.mxu0 0.0
    %1290 = vmatprep.subr.mxu0 0.0
    %1291 = vmatpush1.msra.mxu0 0.0
    %1292 = vmatprep.subr.mxu0 0.0
    %1293 = vmatpush1.msra.mxu0 0.0
    %1294 = vmatprep.subr.mxu0 0.0
    %1295 = vmatpush1.msra.mxu0 0.0
    %1296 = vmatprep.subr.mxu0 0.0
    %1297 = vmatpush1.msra.mxu0 0.0
    %1298 = vmatprep.subr.mxu0 0.0
    %1299 = vmatpush1.msra.mxu0 0.0
    %1300 = vmatprep.subr.mxu0 0.0
    %1301 = vmatpush1.msra.mxu0 0.0
    %1302 = vmatprep.subr.mxu0 0.0
    %1303 = vmatpush1.msra.mxu0 0.0
    %1304 = vmatprep.subr.mxu0 0.0
    %1305 = vmatpush1.msra.mxu0 0.0
    %1306 = vmatprep.subr.mxu0 0.0
    %1307 = vmatpush1.msra.mxu0 0.0
    %1308 = vmatprep.subr.mxu0 0.0
    %1309 = vmatpush1.msra.mxu0 0.0
    %1310 = vmatprep.subr.mxu0 0.0
    %1311 = vmatpush1.msra.mxu0 0.0
    %1312 = vmatprep.subr.mxu0 0.0
    %1313 = vmatpush1.msra.mxu0 0.0
    %1314 = vmatprep.subr.mxu0 0.0
    %1315 = vmatpush1.msra.mxu0 0.0
    %1316 = vmatprep.subr.mxu0 0.0
    %1317 = vmatpush1.msra.mxu0 0.0
    %1318 = vmatprep.mubr.f32.mxu0 0.0
    %v1319 = vand.u32 %v736, 4294901760
    %1320 = vmatmul.mubr.f32.gmra.mrb[0].mxu0 %v1319
    %v1321 = vpop.f32.mrb[0].mxu0
    %v1322 = vadd.f32 %v1235, %v1321
    %v1323 = vpop.f32.mrb[0].mxu0
    %v1324 = vadd.f32 %v1237, %v1323
    %1325 = vmatprep.mubr.f32.mxu0 0.0
    %v1326 = vand.u32 %v739, 4294901760
    %1327 = vmatmul.mubr.f32.gmra.mrb[0].mxu0 %v1326
    %v1328 = vpop.f32.mrb[0].mxu0
    %v1329 = vadd.f32 %v1242, %v1328
    %v1330 = vpop.f32.mrb[0].mxu0
    %v1331 = vadd.f32 %v1244, %v1330
    %1332 = vdwg.mxu0
    %v1333 = vand.u32 2147483647, %v724
    %vm1334 = vcmp.le.f32.partialorder %v1333, 0.7853982
    %vm1335 = vcmp.lt.s32.totalorder %v724, 0
    %v1336 = vand.u32 %v724, 2139095040
    %v1337 = vshrl.u32 %v1336, 23
    %v1338 = vsub.s32 %v1337, 127
    %v1339 = vand.u32 2147483647, %v724
    %v1340 = vand.u32 %v1339, 8388607
    %v1341 = vor.u32 %v1340, 8388608
    %v1342 = vsub.s32 0, %v1341
    %v1343 = vadd.s32 %v1338, 1
    %vm1344 = vcmp.gt.s32.totalorder %v1343, 0
    %v1345 = vsel %vm1344, %v1343, 0
    %v1346 = vshrl.u32 %v1345, 5
    %v1347 = vand.u32 %v1345, 31
    %v1348 = vsub.s32 32, %v1347
    %v1349 = vshrl.u32 683565275, %v1348
    %v1350 = vshll.u32 683565275, %v1347
    %v1351 = vshrl.u32 2475754826, %v1348
    %v1352 = vor.u32 %v1350, %v1351
    %v1353 = vshll.u32 2475754826, %v1347
    %v1354 = vshrl.u32 2131351028, %v1348
    %v1355 = vor.u32 %v1353, %v1354
    %v1356 = vshll.u32 2131351028, %v1347
    %v1357 = vshrl.u32 2102212464, %v1348
    %v1358 = vor.u32 %v1356, %v1357
    %v1359 = vshll.u32 2102212464, %v1347
    %v1360 = vshrl.u32 920167782, %v1348
    %v1361 = vor.u32 %v1359, %v1360
    %v1362 = vshll.u32 920167782, %v1347
    %v1363 = vshrl.u32 1326507024, %v1348
    %v1364 = vor.u32 %v1362, %v1363
    %vm1365 = vcmp.lt.s32.totalorder %v1346, 1
    %vm1366 = vcmp.lt.s32.totalorder %v1346, 2
    %vm1367 = vcmp.lt.s32.totalorder %v1346, 3
    %vm1368 = vcmp.lt.s32.totalorder %v1346, 4
    %v1369 = vsel %vm1365, %v1349, %v1352
    %v1370 = vsel %vm1368, %v1358, 2102212464
    %v1371 = vsel %vm1367, %v1355, %v1370
    %v1372 = vsel %vm1366, %v1369, %v1371
    %v1373 = vsel %vm1365, %v1352, %v1355
    %v1374 = vsel %vm1368, %v1361, 920167782
    %v1375 = vsel %vm1367, %v1358, %v1374
    %v1376 = vsel %vm1366, %v1373, %v1375
    %v1377 = vsel %vm1365, %v1355, %v1358
    %v1378 = vsel %vm1368, %v1364, 1326507024
    %v1379 = vsel %vm1367, %v1361, %v1378
    %v1380 = vsel %vm1366, %v1377, %v1379
    %v1381 = vshll.u32 %v1341, 8
    %v1382 = vmul.u32.u64.compose %v1381, %v1380
    %v1383 = vextract.low.u32 %v1382
    %v1384 = vextract.high.u32 %v1382
    %v1385 = vmul.u32.u64.compose %v1381, %v1376
    %v1386 = vextract.low.u32 %v1385
    %v1387 = vextract.high.u32 %v1385
    %v1388 = vmul.u32 %v1381, %v1372
    %v1389 = vadd.s32 %v1384, %v1386
    %vm1390 = vc.u32 %v1384, %v1386
    %v1391 = vadd.s32 %v1387, 1
    %v1392 = vsel %vm1390, %v1391, %v1387
    %v1393 = vadd.s32 %v1388, %v1392
    %v1394 = vadd.s32 %v1393, 536870912
    %v1395 = vshrl.u32 %v1394, 30
    %v1396 = vshll.u32 %v1395, 30
    %v1397 = vsub.s32 %v1393, %v1396
    %vm1398 = vcmp.lt.s32.totalorder %v1397, 0
    %v1399 = vsub.s32 0, %v1397
    %v1400 = vsel %vm1398, %v1399, %v1397
    %v1401 = vclz %v1400
    %v1402 = vsub.s32 %v1401, 2
    %vm1403 = vcmp.gt.s32.totalorder 0, %v1402
    %v1404 = vsel %vm1403, 0, %v1402
    %v1405 = vsub.s32 32, %v1404
    %v1406 = vshll.u32 %v1397, %v1404
    %v1407 = vshrl.u32 %v1389, %v1405
    %v1408 = vor.u32 %v1406, %v1407
    %v1409 = vsub.s32 4294967266, %v1404
    %v1410 = vadd.s32 %v1409, 127
    %v1411 = vshll.u32 %v1410, 23
    %v1412 = vor.u32 4788187, %v1411
    %v1413 = vand.u32 2147483647, %v1412
    %v1415 = vcvt.s32.f32 %v1408
    %v1416 = vmul.f32 %v1415, %v1413
    %v1417 = vxor.u32 %v1416, 2147483648
    %v1418 = vsel %vm1335, %v1417, %v1416
    %v1419 = vsub.s32 4, %v1395
    %v1420 = vsel %vm1335, %v1419, %v1395
    %v1421 = vsel %vm1334, %v724, %v1418
    %v1422 = vsel %vm1334, 0, %v1420
    %v1423 = vcosq.f32.pop %v1421
    %v1424 = vsinq.f32.pop %v1421
    %vm1425 = vweird.f32 %v724
    %v1426 = vand.u32 %v1422, 3
    %vm1427 = vcmp.lt.s32.totalorder %v1426, 2
    %vm1428 = vcmp.eq.s32.totalorder %v1426, 0
    %v1429 = vxor.u32 %v1424, 2147483648
    %v1430 = vsel %vm1428, %v1423, %v1429
    %vm1431 = vcmp.eq.s32.totalorder %v1426, 2
    %v1432 = vxor.u32 %v1423, 2147483648
    %v1433 = vsel %vm1431, %v1432, %v1424
    %v1434 = vsel %vm1427, %v1430, %v1433
    %v1435 = vsel %vm1425, nan, %v1434
    %v1436 = vand.u32 2147483647, %v726
    %vm1437 = vcmp.le.f32.partialorder %v1436, 0.7853982
    %vm1438 = vcmp.lt.s32.totalorder %v726, 0
    %v1439 = vand.u32 %v726, 2139095040
    %v1440 = vshrl.u32 %v1439, 23
    %v1441 = vsub.s32 %v1440, 127
    %v1442 = vand.u32 2147483647, %v726
    %v1443 = vand.u32 %v1442, 8388607
    %v1444 = vor.u32 %v1443, 8388608
    %v1445 = vsub.s32 0, %v1444
    %v1446 = vadd.s32 %v1441, 1
    %vm1447 = vcmp.gt.s32.totalorder %v1446, 0
    %v1448 = vsel %vm1447, %v1446, 0
    %v1449 = vshrl.u32 %v1448, 5
    %v1450 = vand.u32 %v1448, 31
    %v1451 = vsub.s32 32, %v1450
    %v1452 = vshrl.u32 683565275, %v1451
    %v1453 = vshll.u32 683565275, %v1450
    %v1454 = vshrl.u32 2475754826, %v1451
    %v1455 = vor.u32 %v1453, %v1454
    %v1456 = vshll.u32 2475754826, %v1450
    %v1457 = vshrl.u32 2131351028, %v1451
    %v1458 = vor.u32 %v1456, %v1457
    %v1459 = vshll.u32 2131351028, %v1450
    %v1460 = vshrl.u32 2102212464, %v1451
    %v1461 = vor.u32 %v1459, %v1460
    %v1462 = vshll.u32 2102212464, %v1450
    %v1463 = vshrl.u32 920167782, %v1451
    %v1464 = vor.u32 %v1462, %v1463
    %v1465 = vshll.u32 920167782, %v1450
    %v1466 = vshrl.u32 1326507024, %v1451
    %v1467 = vor.u32 %v1465, %v1466
    %vm1468 = vcmp.lt.s32.totalorder %v1449, 1
    %vm1469 = vcmp.lt.s32.totalorder %v1449, 2
    %vm1470 = vcmp.lt.s32.totalorder %v1449, 3
    %vm1471 = vcmp.lt.s32.totalorder %v1449, 4
    %v1472 = vsel %vm1468, %v1452, %v1455
    %v1473 = vsel %vm1471, %v1461, 2102212464
    %v1474 = vsel %vm1470, %v1458, %v1473
    %v1475 = vsel %vm1469, %v1472, %v1474
    %v1476 = vsel %vm1468, %v1455, %v1458
    %v1477 = vsel %vm1471, %v1464, 920167782
    %v1478 = vsel %vm1470, %v1461, %v1477
    %v1479 = vsel %vm1469, %v1476, %v1478
    %v1480 = vsel %vm1468, %v1458, %v1461
    %v1481 = vsel %vm1471, %v1467, 1326507024
    %v1482 = vsel %vm1470, %v1464, %v1481
    %v1483 = vsel %vm1469, %v1480, %v1482
    %v1484 = vshll.u32 %v1444, 8
    %v1485 = vmul.u32.u64.compose %v1484, %v1483
    %v1486 = vextract.low.u32 %v1485
    %v1487 = vextract.high.u32 %v1485
    %v1488 = vmul.u32.u64.compose %v1484, %v1479
    %v1489 = vextract.low.u32 %v1488
    %v1490 = vextract.high.u32 %v1488
    %v1491 = vmul.u32 %v1484, %v1475
    %v1492 = vadd.s32 %v1487, %v1489
    %vm1493 = vc.u32 %v1487, %v1489
    %v1494 = vadd.s32 %v1490, 1
    %v1495 = vsel %vm1493, %v1494, %v1490
    %v1496 = vadd.s32 %v1491, %v1495
    %v1497 = vadd.s32 %v1496, 536870912
    %v1498 = vshrl.u32 %v1497, 30
    %v1499 = vshll.u32 %v1498, 30
    %v1500 = vsub.s32 %v1496, %v1499
    %vm1501 = vcmp.lt.s32.totalorder %v1500, 0
    %v1502 = vsub.s32 0, %v1500
    %v1503 = vsel %vm1501, %v1502, %v1500
    %v1504 = vclz %v1503
    %v1505 = vsub.s32 %v1504, 2
    %vm1506 = vcmp.gt.s32.totalorder 0, %v1505
    %v1507 = vsel %vm1506, 0, %v1505
    %v1508 = vsub.s32 32, %v1507
    %v1509 = vshll.u32 %v1500, %v1507
    %v1510 = vshrl.u32 %v1492, %v1508
    %v1511 = vor.u32 %v1509, %v1510
    %v1512 = vsub.s32 4294967266, %v1507
    %v1513 = vadd.s32 %v1512, 127
    %v1514 = vshll.u32 %v1513, 23
    %v1515 = vor.u32 4788187, %v1514
    %v1516 = vand.u32 2147483647, %v1515
    %v1518 = vcvt.s32.f32 %v1511
    %v1519 = vmul.f32 %v1518, %v1516
    %v1520 = vxor.u32 %v1519, 2147483648
    %v1521 = vsel %vm1438, %v1520, %v1519
    %v1522 = vsub.s32 4, %v1498
    %v1523 = vsel %vm1438, %v1522, %v1498
    %v1524 = vsel %vm1437, %v726, %v1521
    %v1525 = vsel %vm1437, 0, %v1523
    %v1526 = vcosq.f32.pop %v1524
    %v1527 = vsinq.f32.pop %v1524
    %vm1528 = vweird.f32 %v726
    %v1529 = vand.u32 %v1525, 3
    %vm1530 = vcmp.lt.s32.totalorder %v1529, 2
    %vm1531 = vcmp.eq.s32.totalorder %v1529, 0
    %v1532 = vxor.u32 %v1527, 2147483648
    %v1533 = vsel %vm1531, %v1526, %v1532
    %vm1534 = vcmp.eq.s32.totalorder %v1529, 2
    %v1535 = vxor.u32 %v1526, 2147483648
    %v1536 = vsel %vm1534, %v1535, %v1527
    %v1537 = vsel %vm1530, %v1533, %v1536
    %v1538 = vsel %vm1528, nan, %v1537
    %v1539 = vand.u32 2147483647, %v731
    %vm1540 = vcmp.le.f32.partialorder %v1539, 0.7853982
    %vm1541 = vcmp.lt.s32.totalorder %v731, 0
    %v1542 = vand.u32 %v731, 2139095040
    %v1543 = vshrl.u32 %v1542, 23
    %v1544 = vsub.s32 %v1543, 127
    %v1545 = vand.u32 2147483647, %v731
    %v1546 = vand.u32 %v1545, 8388607
    %v1547 = vor.u32 %v1546, 8388608
    %v1548 = vsub.s32 0, %v1547
    %v1549 = vadd.s32 %v1544, 1
    %vm1550 = vcmp.gt.s32.totalorder %v1549, 0
    %v1551 = vsel %vm1550, %v1549, 0
    %v1552 = vshrl.u32 %v1551, 5
    %v1553 = vand.u32 %v1551, 31
    %v1554 = vsub.s32 32, %v1553
    %v1555 = vshrl.u32 683565275, %v1554
    %v1556 = vshll.u32 683565275, %v1553
    %v1557 = vshrl.u32 2475754826, %v1554
    %v1558 = vor.u32 %v1556, %v1557
    %v1559 = vshll.u32 2475754826, %v1553
    %v1560 = vshrl.u32 2131351028, %v1554
    %v1561 = vor.u32 %v1559, %v1560
    %v1562 = vshll.u32 2131351028, %v1553
    %v1563 = vshrl.u32 2102212464, %v1554
    %v1564 = vor.u32 %v1562, %v1563
    %v1565 = vshll.u32 2102212464, %v1553
    %v1566 = vshrl.u32 920167782, %v1554
    %v1567 = vor.u32 %v1565, %v1566
    %v1568 = vshll.u32 920167782, %v1553
    %v1569 = vshrl.u32 1326507024, %v1554
    %v1570 = vor.u32 %v1568, %v1569
    %vm1571 = vcmp.lt.s32.totalorder %v1552, 1
    %vm1572 = vcmp.lt.s32.totalorder %v1552, 2
    %vm1573 = vcmp.lt.s32.totalorder %v1552, 3
    %vm1574 = vcmp.lt.s32.totalorder %v1552, 4
    %v1575 = vsel %vm1571, %v1555, %v1558
    %v1576 = vsel %vm1574, %v1564, 2102212464
    %v1577 = vsel %vm1573, %v1561, %v1576
    %v1578 = vsel %vm1572, %v1575, %v1577
    %v1579 = vsel %vm1571, %v1558, %v1561
    %v1580 = vsel %vm1574, %v1567, 920167782
    %v1581 = vsel %vm1573, %v1564, %v1580
    %v1582 = vsel %vm1572, %v1579, %v1581
    %v1583 = vsel %vm1571, %v1561, %v1564
    %v1584 = vsel %vm1574, %v1570, 1326507024
    %v1585 = vsel %vm1573, %v1567, %v1584
    %v1586 = vsel %vm1572, %v1583, %v1585
    %v1587 = vshll.u32 %v1547, 8
    %v1588 = vmul.u32.u64.compose %v1587, %v1586
    %v1589 = vextract.low.u32 %v1588
    %v1590 = vextract.high.u32 %v1588
    %v1591 = vmul.u32.u64.compose %v1587, %v1582
    %v1592 = vextract.low.u32 %v1591
    %v1593 = vextract.high.u32 %v1591
    %v1594 = vmul.u32 %v1587, %v1578
    %v1595 = vadd.s32 %v1590, %v1592
    %vm1596 = vc.u32 %v1590, %v1592
    %v1597 = vadd.s32 %v1593, 1
    %v1598 = vsel %vm1596, %v1597, %v1593
    %v1599 = vadd.s32 %v1594, %v1598
    %v1600 = vadd.s32 %v1599, 536870912
    %v1601 = vshrl.u32 %v1600, 30
    %v1602 = vshll.u32 %v1601, 30
    %v1603 = vsub.s32 %v1599, %v1602
    %vm1604 = vcmp.lt.s32.totalorder %v1603, 0
    %v1605 = vsub.s32 0, %v1603
    %v1606 = vsel %vm1604, %v1605, %v1603
    %v1607 = vclz %v1606
    %v1608 = vsub.s32 %v1607, 2
    %vm1609 = vcmp.gt.s32.totalorder 0, %v1608
    %v1610 = vsel %vm1609, 0, %v1608
    %v1611 = vsub.s32 32, %v1610
    %v1612 = vshll.u32 %v1603, %v1610
    %v1613 = vshrl.u32 %v1595, %v1611
    %v1614 = vor.u32 %v1612, %v1613
    %v1615 = vsub.s32 4294967266, %v1610
    %v1616 = vadd.s32 %v1615, 127
    %v1617 = vshll.u32 %v1616, 23
    %v1618 = vor.u32 4788187, %v1617
    %v1619 = vand.u32 2147483647, %v1618
    %v1621 = vcvt.s32.f32 %v1614
    %v1622 = vmul.f32 %v1621, %v1619
    %v1623 = vxor.u32 %v1622, 2147483648
    %v1624 = vsel %vm1541, %v1623, %v1622
    %v1625 = vsub.s32 4, %v1601
    %v1626 = vsel %vm1541, %v1625, %v1601
    %v1627 = vsel %vm1540, %v731, %v1624
    %v1628 = vsel %vm1540, 0, %v1626
    %v1629 = vcosq.f32.pop %v1627
    %v1630 = vsinq.f32.pop %v1627
    %vm1631 = vweird.f32 %v731
    %v1632 = vand.u32 %v1628, 3
    %vm1633 = vcmp.lt.s32.totalorder %v1632, 2
    %vm1634 = vcmp.eq.s32.totalorder %v1632, 0
    %v1635 = vxor.u32 %v1630, 2147483648
    %v1636 = vsel %vm1634, %v1629, %v1635
    %vm1637 = vcmp.eq.s32.totalorder %v1632, 2
    %v1638 = vxor.u32 %v1629, 2147483648
    %v1639 = vsel %vm1637, %v1638, %v1630
    %v1640 = vsel %vm1633, %v1636, %v1639
    %v1641 = vsel %vm1631, nan, %v1640
    %v1642 = vand.u32 2147483647, %v733
    %vm1643 = vcmp.le.f32.partialorder %v1642, 0.7853982
    %vm1644 = vcmp.lt.s32.totalorder %v733, 0
    %v1645 = vand.u32 %v733, 2139095040
    %v1646 = vshrl.u32 %v1645, 23
    %v1647 = vsub.s32 %v1646, 127
    %v1648 = vand.u32 2147483647, %v733
    %v1649 = vand.u32 %v1648, 8388607
    %v1650 = vor.u32 %v1649, 8388608
    %v1651 = vsub.s32 0, %v1650
    %v1652 = vadd.s32 %v1647, 1
    %vm1653 = vcmp.gt.s32.totalorder %v1652, 0
    %v1654 = vsel %vm1653, %v1652, 0
    %v1655 = vshrl.u32 %v1654, 5
    %v1656 = vand.u32 %v1654, 31
    %v1657 = vsub.s32 32, %v1656
    %v1658 = vshrl.u32 683565275, %v1657
    %v1659 = vshll.u32 683565275, %v1656
    %v1660 = vshrl.u32 2475754826, %v1657
    %v1661 = vor.u32 %v1659, %v1660
    %v1662 = vshll.u32 2475754826, %v1656
    %v1663 = vshrl.u32 2131351028, %v1657
    %v1664 = vor.u32 %v1662, %v1663
    %v1665 = vshll.u32 2131351028, %v1656
    %v1666 = vshrl.u32 2102212464, %v1657
    %v1667 = vor.u32 %v1665, %v1666
    %v1668 = vshll.u32 2102212464, %v1656
    %v1669 = vshrl.u32 920167782, %v1657
    %v1670 = vor.u32 %v1668, %v1669
    %v1671 = vshll.u32 920167782, %v1656
    %v1672 = vshrl.u32 1326507024, %v1657
    %v1673 = vor.u32 %v1671, %v1672
    %vm1674 = vcmp.lt.s32.totalorder %v1655, 1
    %vm1675 = vcmp.lt.s32.totalorder %v1655, 2
    %vm1676 = vcmp.lt.s32.totalorder %v1655, 3
    %vm1677 = vcmp.lt.s32.totalorder %v1655, 4
    %v1678 = vsel %vm1674, %v1658, %v1661
    %v1679 = vsel %vm1677, %v1667, 2102212464
    %v1680 = vsel %vm1676, %v1664, %v1679
    %v1681 = vsel %vm1675, %v1678, %v1680
    %v1682 = vsel %vm1674, %v1661, %v1664
    %v1683 = vsel %vm1677, %v1670, 920167782
    %v1684 = vsel %vm1676, %v1667, %v1683
    %v1685 = vsel %vm1675, %v1682, %v1684
    %v1686 = vsel %vm1674, %v1664, %v1667
    %v1687 = vsel %vm1677, %v1673, 1326507024
    %v1688 = vsel %vm1676, %v1670, %v1687
    %v1689 = vsel %vm1675, %v1686, %v1688
    %v1690 = vshll.u32 %v1650, 8
    %v1691 = vmul.u32.u64.compose %v1690, %v1689
    %v1692 = vextract.low.u32 %v1691
    %v1693 = vextract.high.u32 %v1691
    %v1694 = vmul.u32.u64.compose %v1690, %v1685
    %v1695 = vextract.low.u32 %v1694
    %v1696 = vextract.high.u32 %v1694
    %v1697 = vmul.u32 %v1690, %v1681
    %v1698 = vadd.s32 %v1693, %v1695
    %vm1699 = vc.u32 %v1693, %v1695
    %v1700 = vadd.s32 %v1696, 1
    %v1701 = vsel %vm1699, %v1700, %v1696
    %v1702 = vadd.s32 %v1697, %v1701
    %v1703 = vadd.s32 %v1702, 536870912
    %v1704 = vshrl.u32 %v1703, 30
    %v1705 = vshll.u32 %v1704, 30
    %v1706 = vsub.s32 %v1702, %v1705
    %vm1707 = vcmp.lt.s32.totalorder %v1706, 0
    %v1708 = vsub.s32 0, %v1706
    %v1709 = vsel %vm1707, %v1708, %v1706
    %v1710 = vclz %v1709
    %v1711 = vsub.s32 %v1710, 2
    %vm1712 = vcmp.gt.s32.totalorder 0, %v1711
    %v1713 = vsel %vm1712, 0, %v1711
    %v1714 = vsub.s32 32, %v1713
    %v1715 = vshll.u32 %v1706, %v1713
    %v1716 = vshrl.u32 %v1698, %v1714
    %v1717 = vor.u32 %v1715, %v1716
    %v1718 = vsub.s32 4294967266, %v1713
    %v1719 = vadd.s32 %v1718, 127
    %v1720 = vshll.u32 %v1719, 23
    %v1721 = vor.u32 4788187, %v1720
    %v1722 = vand.u32 2147483647, %v1721
    %v1724 = vcvt.s32.f32 %v1717
    %v1725 = vmul.f32 %v1724, %v1722
    %v1726 = vxor.u32 %v1725, 2147483648
    %v1727 = vsel %vm1644, %v1726, %v1725
    %v1728 = vsub.s32 4, %v1704
    %v1729 = vsel %vm1644, %v1728, %v1704
    %v1730 = vsel %vm1643, %v733, %v1727
    %v1731 = vsel %vm1643, 0, %v1729
    %v1732 = vcosq.f32.pop %v1730
    %v1733 = vsinq.f32.pop %v1730
    %vm1734 = vweird.f32 %v733
    %v1735 = vand.u32 %v1731, 3
    %vm1736 = vcmp.lt.s32.totalorder %v1735, 2
    %vm1737 = vcmp.eq.s32.totalorder %v1735, 0
    %v1738 = vxor.u32 %v1733, 2147483648
    %v1739 = vsel %vm1737, %v1732, %v1738
    %vm1740 = vcmp.eq.s32.totalorder %v1735, 2
    %v1741 = vxor.u32 %v1732, 2147483648
    %v1742 = vsel %vm1740, %v1741, %v1733
    %v1743 = vsel %vm1736, %v1739, %v1742
    %v1744 = vsel %vm1734, nan, %v1743
    %v1745 = vand.u32 2147483647, %v1322
    %vm1746 = vcmp.le.f32.partialorder %v1745, 0.7853982
    %vm1747 = vcmp.lt.s32.totalorder %v1322, 0
    %v1748 = vand.u32 %v1322, 2139095040
    %v1749 = vshrl.u32 %v1748, 23
    %v1750 = vsub.s32 %v1749, 127
    %v1751 = vand.u32 2147483647, %v1322
    %v1752 = vand.u32 %v1751, 8388607
    %v1753 = vor.u32 %v1752, 8388608
    %v1754 = vsub.s32 0, %v1753
    %v1755 = vadd.s32 %v1750, 1
    %vm1756 = vcmp.gt.s32.totalorder %v1755, 0
    %v1757 = vsel %vm1756, %v1755, 0
    %v1758 = vshrl.u32 %v1757, 5
    %v1759 = vand.u32 %v1757, 31
    %v1760 = vsub.s32 32, %v1759
    %v1761 = vshrl.u32 683565275, %v1760
    %v1762 = vshll.u32 683565275, %v1759
    %v1763 = vshrl.u32 2475754826, %v1760
    %v1764 = vor.u32 %v1762, %v1763
    %v1765 = vshll.u32 2475754826, %v1759
    %v1766 = vshrl.u32 2131351028, %v1760
    %v1767 = vor.u32 %v1765, %v1766
    %v1768 = vshll.u32 2131351028, %v1759
    %v1769 = vshrl.u32 2102212464, %v1760
    %v1770 = vor.u32 %v1768, %v1769
    %v1771 = vshll.u32 2102212464, %v1759
    %v1772 = vshrl.u32 920167782, %v1760
    %v1773 = vor.u32 %v1771, %v1772
    %v1774 = vshll.u32 920167782, %v1759
    %v1775 = vshrl.u32 1326507024, %v1760
    %v1776 = vor.u32 %v1774, %v1775
    %vm1777 = vcmp.lt.s32.totalorder %v1758, 1
    %vm1778 = vcmp.lt.s32.totalorder %v1758, 2
    %vm1779 = vcmp.lt.s32.totalorder %v1758, 3
    %vm1780 = vcmp.lt.s32.totalorder %v1758, 4
    %v1781 = vsel %vm1777, %v1761, %v1764
    %v1782 = vsel %vm1780, %v1770, 2102212464
    %v1783 = vsel %vm1779, %v1767, %v1782
    %v1784 = vsel %vm1778, %v1781, %v1783
    %v1785 = vsel %vm1777, %v1764, %v1767
    %v1786 = vsel %vm1780, %v1773, 920167782
    %v1787 = vsel %vm1779, %v1770, %v1786
    %v1788 = vsel %vm1778, %v1785, %v1787
    %v1789 = vsel %vm1777, %v1767, %v1770
    %v1790 = vsel %vm1780, %v1776, 1326507024
    %v1791 = vsel %vm1779, %v1773, %v1790
    %v1792 = vsel %vm1778, %v1789, %v1791
    %v1793 = vshll.u32 %v1753, 8
    %v1794 = vmul.u32.u64.compose %v1793, %v1792
    %v1795 = vextract.low.u32 %v1794
    %v1796 = vextract.high.u32 %v1794
    %v1797 = vmul.u32.u64.compose %v1793, %v1788
    %v1798 = vextract.low.u32 %v1797
    %v1799 = vextract.high.u32 %v1797
    %v1800 = vmul.u32 %v1793, %v1784
    %v1801 = vadd.s32 %v1796, %v1798
    %vm1802 = vc.u32 %v1796, %v1798
    %v1803 = vadd.s32 %v1799, 1
    %v1804 = vsel %vm1802, %v1803, %v1799
    %v1805 = vadd.s32 %v1800, %v1804
    %v1806 = vadd.s32 %v1805, 536870912
    %v1807 = vshrl.u32 %v1806, 30
    %v1808 = vshll.u32 %v1807, 30
    %v1809 = vsub.s32 %v1805, %v1808
    %vm1810 = vcmp.lt.s32.totalorder %v1809, 0
    %v1811 = vsub.s32 0, %v1809
    %v1812 = vsel %vm1810, %v1811, %v1809
    %v1813 = vclz %v1812
    %v1814 = vsub.s32 %v1813, 2
    %vm1815 = vcmp.gt.s32.totalorder 0, %v1814
    %v1816 = vsel %vm1815, 0, %v1814
    %v1817 = vsub.s32 32, %v1816
    %v1818 = vshll.u32 %v1809, %v1816
    %v1819 = vshrl.u32 %v1801, %v1817
    %v1820 = vor.u32 %v1818, %v1819
    %v1821 = vsub.s32 4294967266, %v1816
    %v1822 = vadd.s32 %v1821, 127
    %v1823 = vshll.u32 %v1822, 23
    %v1824 = vor.u32 4788187, %v1823
    %v1825 = vand.u32 2147483647, %v1824
    %v1827 = vcvt.s32.f32 %v1820
    %v1828 = vmul.f32 %v1827, %v1825
    %v1829 = vxor.u32 %v1828, 2147483648
    %v1830 = vsel %vm1747, %v1829, %v1828
    %v1831 = vsub.s32 4, %v1807
    %v1832 = vsel %vm1747, %v1831, %v1807
    %v1833 = vsel %vm1746, %v1322, %v1830
    %v1834 = vsel %vm1746, 0, %v1832
    %v1835 = vcosq.f32.pop %v1833
    %v1836 = vsinq.f32.pop %v1833
    %vm1837 = vweird.f32 %v1322
    %v1838 = vand.u32 %v1834, 3
    %vm1839 = vcmp.lt.s32.totalorder %v1838, 2
    %vm1840 = vcmp.eq.s32.totalorder %v1838, 0
    %v1841 = vxor.u32 %v1836, 2147483648
    %v1842 = vsel %vm1840, %v1835, %v1841
    %vm1843 = vcmp.eq.s32.totalorder %v1838, 2
    %v1844 = vxor.u32 %v1835, 2147483648
    %v1845 = vsel %vm1843, %v1844, %v1836
    %v1846 = vsel %vm1839, %v1842, %v1845
    %v1847 = vsel %vm1837, nan, %v1846
    %v1848 = vand.u32 2147483647, %v1324
    %vm1849 = vcmp.le.f32.partialorder %v1848, 0.7853982
    %vm1850 = vcmp.lt.s32.totalorder %v1324, 0
    %v1851 = vand.u32 %v1324, 2139095040
    %v1852 = vshrl.u32 %v1851, 23
    %v1853 = vsub.s32 %v1852, 127
    %v1854 = vand.u32 2147483647, %v1324
    %v1855 = vand.u32 %v1854, 8388607
    %v1856 = vor.u32 %v1855, 8388608
    %v1857 = vsub.s32 0, %v1856
    %v1858 = vadd.s32 %v1853, 1
    %vm1859 = vcmp.gt.s32.totalorder %v1858, 0
    %v1860 = vsel %vm1859, %v1858, 0
    %v1861 = vshrl.u32 %v1860, 5
    %v1862 = vand.u32 %v1860, 31
    %v1863 = vsub.s32 32, %v1862
    %v1864 = vshrl.u32 683565275, %v1863
    %v1865 = vshll.u32 683565275, %v1862
    %v1866 = vshrl.u32 2475754826, %v1863
    %v1867 = vor.u32 %v1865, %v1866
    %v1868 = vshll.u32 2475754826, %v1862
    %v1869 = vshrl.u32 2131351028, %v1863
    %v1870 = vor.u32 %v1868, %v1869
    %v1871 = vshll.u32 2131351028, %v1862
    %v1872 = vshrl.u32 2102212464, %v1863
    %v1873 = vor.u32 %v1871, %v1872
    %v1874 = vshll.u32 2102212464, %v1862
    %v1875 = vshrl.u32 920167782, %v1863
    %v1876 = vor.u32 %v1874, %v1875
    %v1877 = vshll.u32 920167782, %v1862
    %v1878 = vshrl.u32 1326507024, %v1863
    %v1879 = vor.u32 %v1877, %v1878
    %vm1880 = vcmp.lt.s32.totalorder %v1861, 1
    %vm1881 = vcmp.lt.s32.totalorder %v1861, 2
    %vm1882 = vcmp.lt.s32.totalorder %v1861, 3
    %vm1883 = vcmp.lt.s32.totalorder %v1861, 4
    %v1884 = vsel %vm1880, %v1864, %v1867
    %v1885 = vsel %vm1883, %v1873, 2102212464
    %v1886 = vsel %vm1882, %v1870, %v1885
    %v1887 = vsel %vm1881, %v1884, %v1886
    %v1888 = vsel %vm1880, %v1867, %v1870
    %v1889 = vsel %vm1883, %v1876, 920167782
    %v1890 = vsel %vm1882, %v1873, %v1889
    %v1891 = vsel %vm1881, %v1888, %v1890
    %v1892 = vsel %vm1880, %v1870, %v1873
    %v1893 = vsel %vm1883, %v1879, 1326507024
    %v1894 = vsel %vm1882, %v1876, %v1893
    %v1895 = vsel %vm1881, %v1892, %v1894
    %v1896 = vshll.u32 %v1856, 8
    %v1897 = vmul.u32.u64.compose %v1896, %v1895
    %v1898 = vextract.low.u32 %v1897
    %v1899 = vextract.high.u32 %v1897
    %v1900 = vmul.u32.u64.compose %v1896, %v1891
    %v1901 = vextract.low.u32 %v1900
    %v1902 = vextract.high.u32 %v1900
    %v1903 = vmul.u32 %v1896, %v1887
    %v1904 = vadd.s32 %v1899, %v1901
    %vm1905 = vc.u32 %v1899, %v1901
    %v1906 = vadd.s32 %v1902, 1
    %v1907 = vsel %vm1905, %v1906, %v1902
    %v1908 = vadd.s32 %v1903, %v1907
    %v1909 = vadd.s32 %v1908, 536870912
    %v1910 = vshrl.u32 %v1909, 30
    %v1911 = vshll.u32 %v1910, 30
    %v1912 = vsub.s32 %v1908, %v1911
    %vm1913 = vcmp.lt.s32.totalorder %v1912, 0
    %v1914 = vsub.s32 0, %v1912
    %v1915 = vsel %vm1913, %v1914, %v1912
    %v1916 = vclz %v1915
    %v1917 = vsub.s32 %v1916, 2
    %vm1918 = vcmp.gt.s32.totalorder 0, %v1917
    %v1919 = vsel %vm1918, 0, %v1917
    %v1920 = vsub.s32 32, %v1919
    %v1921 = vshll.u32 %v1912, %v1919
    %v1922 = vshrl.u32 %v1904, %v1920
    %v1923 = vor.u32 %v1921, %v1922
    %v1924 = vsub.s32 4294967266, %v1919
    %v1925 = vadd.s32 %v1924, 127
    %v1926 = vshll.u32 %v1925, 23
    %v1927 = vor.u32 4788187, %v1926
    %v1928 = vand.u32 2147483647, %v1927
    %v1930 = vcvt.s32.f32 %v1923
    %v1931 = vmul.f32 %v1930, %v1928
    %v1932 = vxor.u32 %v1931, 2147483648
    %v1933 = vsel %vm1850, %v1932, %v1931
    %v1934 = vsub.s32 4, %v1910
    %v1935 = vsel %vm1850, %v1934, %v1910
    %v1936 = vsel %vm1849, %v1324, %v1933
    %v1937 = vsel %vm1849, 0, %v1935
    %v1938 = vcosq.f32.pop %v1936
    %v1939 = vsinq.f32.pop %v1936
    %vm1940 = vweird.f32 %v1324
    %v1941 = vand.u32 %v1937, 3
    %vm1942 = vcmp.lt.s32.totalorder %v1941, 2
    %vm1943 = vcmp.eq.s32.totalorder %v1941, 0
    %v1944 = vxor.u32 %v1939, 2147483648
    %v1945 = vsel %vm1943, %v1938, %v1944
    %vm1946 = vcmp.eq.s32.totalorder %v1941, 2
    %v1947 = vxor.u32 %v1938, 2147483648
    %v1948 = vsel %vm1946, %v1947, %v1939
    %v1949 = vsel %vm1942, %v1945, %v1948
    %v1950 = vsel %vm1940, nan, %v1949
    %v1951 = vand.u32 2147483647, %v1329
    %vm1952 = vcmp.le.f32.partialorder %v1951, 0.7853982
    %vm1953 = vcmp.lt.s32.totalorder %v1329, 0
    %v1954 = vand.u32 %v1329, 2139095040
    %v1955 = vshrl.u32 %v1954, 23
    %v1956 = vsub.s32 %v1955, 127
    %v1957 = vand.u32 2147483647, %v1329
    %v1958 = vand.u32 %v1957, 8388607
    %v1959 = vor.u32 %v1958, 8388608
    %v1960 = vsub.s32 0, %v1959
    %v1961 = vadd.s32 %v1956, 1
    %vm1962 = vcmp.gt.s32.totalorder %v1961, 0
    %v1963 = vsel %vm1962, %v1961, 0
    %v1964 = vshrl.u32 %v1963, 5
    %v1965 = vand.u32 %v1963, 31
    %v1966 = vsub.s32 32, %v1965
    %v1967 = vshrl.u32 683565275, %v1966
    %v1968 = vshll.u32 683565275, %v1965
    %v1969 = vshrl.u32 2475754826, %v1966
    %v1970 = vor.u32 %v1968, %v1969
    %v1971 = vshll.u32 2475754826, %v1965
    %v1972 = vshrl.u32 2131351028, %v1966
    %v1973 = vor.u32 %v1971, %v1972
    %v1974 = vshll.u32 2131351028, %v1965
    %v1975 = vshrl.u32 2102212464, %v1966
    %v1976 = vor.u32 %v1974, %v1975
    %v1977 = vshll.u32 2102212464, %v1965
    %v1978 = vshrl.u32 920167782, %v1966
    %v1979 = vor.u32 %v1977, %v1978
    %v1980 = vshll.u32 920167782, %v1965
    %v1981 = vshrl.u32 1326507024, %v1966
    %v1982 = vor.u32 %v1980, %v1981
    %vm1983 = vcmp.lt.s32.totalorder %v1964, 1
    %vm1984 = vcmp.lt.s32.totalorder %v1964, 2
    %vm1985 = vcmp.lt.s32.totalorder %v1964, 3
    %vm1986 = vcmp.lt.s32.totalorder %v1964, 4
    %v1987 = vsel %vm1983, %v1967, %v1970
    %v1988 = vsel %vm1986, %v1976, 2102212464
    %v1989 = vsel %vm1985, %v1973, %v1988
    %v1990 = vsel %vm1984, %v1987, %v1989
    %v1991 = vsel %vm1983, %v1970, %v1973
    %v1992 = vsel %vm1986, %v1979, 920167782
    %v1993 = vsel %vm1985, %v1976, %v1992
    %v1994 = vsel %vm1984, %v1991, %v1993
    %v1995 = vsel %vm1983, %v1973, %v1976
    %v1996 = vsel %vm1986, %v1982, 1326507024
    %v1997 = vsel %vm1985, %v1979, %v1996
    %v1998 = vsel %vm1984, %v1995, %v1997
    %v1999 = vshll.u32 %v1959, 8
    %v2000 = vmul.u32.u64.compose %v1999, %v1998
    %v2001 = vextract.low.u32 %v2000
    %v2002 = vextract.high.u32 %v2000
    %v2003 = vmul.u32.u64.compose %v1999, %v1994
    %v2004 = vextract.low.u32 %v2003
    %v2005 = vextract.high.u32 %v2003
    %v2006 = vmul.u32 %v1999, %v1990
    %v2007 = vadd.s32 %v2002, %v2004
    %vm2008 = vc.u32 %v2002, %v2004
    %v2009 = vadd.s32 %v2005, 1
    %v2010 = vsel %vm2008, %v2009, %v2005
    %v2011 = vadd.s32 %v2006, %v2010
    %v2012 = vadd.s32 %v2011, 536870912
    %v2013 = vshrl.u32 %v2012, 30
    %v2014 = vshll.u32 %v2013, 30
    %v2015 = vsub.s32 %v2011, %v2014
    %vm2016 = vcmp.lt.s32.totalorder %v2015, 0
    %v2017 = vsub.s32 0, %v2015
    %v2018 = vsel %vm2016, %v2017, %v2015
    %v2019 = vclz %v2018
    %v2020 = vsub.s32 %v2019, 2
    %vm2021 = vcmp.gt.s32.totalorder 0, %v2020
    %v2022 = vsel %vm2021, 0, %v2020
    %v2023 = vsub.s32 32, %v2022
    %v2024 = vshll.u32 %v2015, %v2022
    %v2025 = vshrl.u32 %v2007, %v2023
    %v2026 = vor.u32 %v2024, %v2025
    %v2027 = vsub.s32 4294967266, %v2022
    %v2028 = vadd.s32 %v2027, 127
    %v2029 = vshll.u32 %v2028, 23
    %v2030 = vor.u32 4788187, %v2029
    %v2031 = vand.u32 2147483647, %v2030
    %v2033 = vcvt.s32.f32 %v2026
    %v2034 = vmul.f32 %v2033, %v2031
    %v2035 = vxor.u32 %v2034, 2147483648
    %v2036 = vsel %vm1953, %v2035, %v2034
    %v2037 = vsub.s32 4, %v2013
    %v2038 = vsel %vm1953, %v2037, %v2013
    %v2039 = vsel %vm1952, %v1329, %v2036
    %v2040 = vsel %vm1952, 0, %v2038
    %v2041 = vcosq.f32.pop %v2039
    %v2042 = vsinq.f32.pop %v2039
    %vm2043 = vweird.f32 %v1329
    %v2044 = vand.u32 %v2040, 3
    %vm2045 = vcmp.lt.s32.totalorder %v2044, 2
    %vm2046 = vcmp.eq.s32.totalorder %v2044, 0
    %v2047 = vxor.u32 %v2042, 2147483648
    %v2048 = vsel %vm2046, %v2041, %v2047
    %vm2049 = vcmp.eq.s32.totalorder %v2044, 2
    %v2050 = vxor.u32 %v2041, 2147483648
    %v2051 = vsel %vm2049, %v2050, %v2042
    %v2052 = vsel %vm2045, %v2048, %v2051
    %v2053 = vsel %vm2043, nan, %v2052
    %v2054 = vand.u32 2147483647, %v1331
    %vm2055 = vcmp.le.f32.partialorder %v2054, 0.7853982
    %vm2056 = vcmp.lt.s32.totalorder %v1331, 0
    %v2057 = vand.u32 %v1331, 2139095040
    %v2058 = vshrl.u32 %v2057, 23
    %v2059 = vsub.s32 %v2058, 127
    %v2060 = vand.u32 2147483647, %v1331
    %v2061 = vand.u32 %v2060, 8388607
    %v2062 = vor.u32 %v2061, 8388608
    %v2063 = vsub.s32 0, %v2062
    %v2064 = vadd.s32 %v2059, 1
    %vm2065 = vcmp.gt.s32.totalorder %v2064, 0
    %v2066 = vsel %vm2065, %v2064, 0
    %v2067 = vshrl.u32 %v2066, 5
    %v2068 = vand.u32 %v2066, 31
    %v2069 = vsub.s32 32, %v2068
    %v2070 = vshrl.u32 683565275, %v2069
    %v2071 = vshll.u32 683565275, %v2068
    %v2072 = vshrl.u32 2475754826, %v2069
    %v2073 = vor.u32 %v2071, %v2072
    %v2074 = vshll.u32 2475754826, %v2068
    %v2075 = vshrl.u32 2131351028, %v2069
    %v2076 = vor.u32 %v2074, %v2075
    %v2077 = vshll.u32 2131351028, %v2068
    %v2078 = vshrl.u32 2102212464, %v2069
    %v2079 = vor.u32 %v2077, %v2078
    %v2080 = vshll.u32 2102212464, %v2068
    %v2081 = vshrl.u32 920167782, %v2069
    %v2082 = vor.u32 %v2080, %v2081
    %v2083 = vshll.u32 920167782, %v2068
    %v2084 = vshrl.u32 1326507024, %v2069
    %v2085 = vor.u32 %v2083, %v2084
    %vm2086 = vcmp.lt.s32.totalorder %v2067, 1
    %vm2087 = vcmp.lt.s32.totalorder %v2067, 2
    %vm2088 = vcmp.lt.s32.totalorder %v2067, 3
    %vm2089 = vcmp.lt.s32.totalorder %v2067, 4
    %v2090 = vsel %vm2086, %v2070, %v2073
    %v2091 = vsel %vm2089, %v2079, 2102212464
    %v2092 = vsel %vm2088, %v2076, %v2091
    %v2093 = vsel %vm2087, %v2090, %v2092
    %v2094 = vsel %vm2086, %v2073, %v2076
    %v2095 = vsel %vm2089, %v2082, 920167782
    %v2096 = vsel %vm2088, %v2079, %v2095
    %v2097 = vsel %vm2087, %v2094, %v2096
    %v2098 = vsel %vm2086, %v2076, %v2079
    %v2099 = vsel %vm2089, %v2085, 1326507024
    %v2100 = vsel %vm2088, %v2082, %v2099
    %v2101 = vsel %vm2087, %v2098, %v2100
    %v2102 = vshll.u32 %v2062, 8
    %v2103 = vmul.u32.u64.compose %v2102, %v2101
    %v2104 = vextract.low.u32 %v2103
    %v2105 = vextract.high.u32 %v2103
    %v2106 = vmul.u32.u64.compose %v2102, %v2097
    %v2107 = vextract.low.u32 %v2106
    %v2108 = vextract.high.u32 %v2106
    %v2109 = vmul.u32 %v2102, %v2093
    %v2110 = vadd.s32 %v2105, %v2107
    %vm2111 = vc.u32 %v2105, %v2107
    %v2112 = vadd.s32 %v2108, 1
    %v2113 = vsel %vm2111, %v2112, %v2108
    %v2114 = vadd.s32 %v2109, %v2113
    %v2115 = vadd.s32 %v2114, 536870912
    %v2116 = vshrl.u32 %v2115, 30
    %v2117 = vshll.u32 %v2116, 30
    %v2118 = vsub.s32 %v2114, %v2117
    %vm2119 = vcmp.lt.s32.totalorder %v2118, 0
    %v2120 = vsub.s32 0, %v2118
    %v2121 = vsel %vm2119, %v2120, %v2118
    %v2122 = vclz %v2121
    %v2123 = vsub.s32 %v2122, 2
    %vm2124 = vcmp.gt.s32.totalorder 0, %v2123
    %v2125 = vsel %vm2124, 0, %v2123
    %v2126 = vsub.s32 32, %v2125
    %v2127 = vshll.u32 %v2118, %v2125
    %v2128 = vshrl.u32 %v2110, %v2126
    %v2129 = vor.u32 %v2127, %v2128
    %v2130 = vsub.s32 4294967266, %v2125
    %v2131 = vadd.s32 %v2130, 127
    %v2132 = vshll.u32 %v2131, 23
    %v2133 = vor.u32 4788187, %v2132
    %v2134 = vand.u32 2147483647, %v2133
    %v2136 = vcvt.s32.f32 %v2129
    %v2137 = vmul.f32 %v2136, %v2134
    %v2138 = vxor.u32 %v2137, 2147483648
    %v2139 = vsel %vm2056, %v2138, %v2137
    %v2140 = vsub.s32 4, %v2116
    %v2141 = vsel %vm2056, %v2140, %v2116
    %v2142 = vsel %vm2055, %v1331, %v2139
    %v2143 = vsel %vm2055, 0, %v2141
    %v2144 = vcosq.f32.pop %v2142
    %v2145 = vsinq.f32.pop %v2142
    %vm2146 = vweird.f32 %v1331
    %v2147 = vand.u32 %v2143, 3
    %vm2148 = vcmp.lt.s32.totalorder %v2147, 2
    %vm2149 = vcmp.eq.s32.totalorder %v2147, 0
    %v2150 = vxor.u32 %v2145, 2147483648
    %v2151 = vsel %vm2149, %v2144, %v2150
    %vm2152 = vcmp.eq.s32.totalorder %v2147, 2
    %v2153 = vxor.u32 %v2144, 2147483648
    %v2154 = vsel %vm2152, %v2153, %v2145
    %v2155 = vsel %vm2148, %v2151, %v2154
    %v2156 = vsel %vm2146, nan, %v2155
    %v2157 = vadd.f32 %v1435, %v1847
    %v2158 = vadd.f32 %v1538, %v1950
    %v2159 = vadd.f32 %v1641, %v2053
    %v2160 = vadd.f32 %v1744, %v2156
    %v2161 = vsel %vm66, 1, 0
    %v2162 = vsel %vm67, 1, 0
    %vm2163 = vcmp.eq.s32.totalorder %v2161, 1
    %vm2164 = vcmp.eq.s32.totalorder %v2162, 1
    %v2165 = vsel %vm2163, %v2157, 0.0
    %v2166 = vsel %vm2163, %v2158, 0.0
    %v2167 = vsel %vm2164, %v2159, 0.0
    %v2168 = vsel %vm2164, %v2160, 0.0
    %v2169 = vadd.f32 %v2165, %v2167
    %v2170 = vrot.slane %v2169, 4
    %v2171 = vadd.f32 %v2169, %v2170
    %v2172 = vrot.slane %v2171, 2
    %v2173 = vadd.f32 %v2171, %v2172
    %v2174 = vrot.slane %v2173, 1
    %v2175 = vadd.f32 %v2173, %v2174
    %v2176 = vadd.f32 %v2166, %v2168
    %v2177 = vrot.slane %v2176, 4
    %v2178 = vadd.f32 %v2176, %v2177
    %v2179 = vrot.slane %v2178, 2
    %v2180 = vadd.f32 %v2178, %v2179
    %v2181 = vrot.slane %v2180, 1
    %v2182 = vadd.f32 %v2180, %v2181
    %v2183 = vmul.f32 %v2175, 0.0625
    %v2184 = vmul.f32 %v2182, 0.0625
    %v2185 = vand.u32 2147483647, %v724
    %vm2186 = vcmp.le.f32.partialorder %v2185, 0.7853982
    %vm2187 = vcmp.lt.s32.totalorder %v724, 0
    %v2188 = vand.u32 %v724, 2139095040
    %v2189 = vshrl.u32 %v2188, 23
    %v2190 = vsub.s32 %v2189, 127
    %v2191 = vand.u32 2147483647, %v724
    %v2192 = vand.u32 %v2191, 8388607
    %v2193 = vor.u32 %v2192, 8388608
    %v2194 = vsub.s32 0, %v2193
    %v2195 = vadd.s32 %v2190, 1
    %vm2196 = vcmp.gt.s32.totalorder %v2195, 0
    %v2197 = vsel %vm2196, %v2195, 0
    %v2198 = vshrl.u32 %v2197, 5
    %v2199 = vand.u32 %v2197, 31
    %v2200 = vsub.s32 32, %v2199
    %v2201 = vshrl.u32 683565275, %v2200
    %v2202 = vshll.u32 683565275, %v2199
    %v2203 = vshrl.u32 2475754826, %v2200
    %v2204 = vor.u32 %v2202, %v2203
    %v2205 = vshll.u32 2475754826, %v2199
    %v2206 = vshrl.u32 2131351028, %v2200
    %v2207 = vor.u32 %v2205, %v2206
    %v2208 = vshll.u32 2131351028, %v2199
    %v2209 = vshrl.u32 2102212464, %v2200
    %v2210 = vor.u32 %v2208, %v2209
    %v2211 = vshll.u32 2102212464, %v2199
    %v2212 = vshrl.u32 920167782, %v2200
    %v2213 = vor.u32 %v2211, %v2212
    %v2214 = vshll.u32 920167782, %v2199
    %v2215 = vshrl.u32 1326507024, %v2200
    %v2216 = vor.u32 %v2214, %v2215
    %vm2217 = vcmp.lt.s32.totalorder %v2198, 1
    %vm2218 = vcmp.lt.s32.totalorder %v2198, 2
    %vm2219 = vcmp.lt.s32.totalorder %v2198, 3
    %vm2220 = vcmp.lt.s32.totalorder %v2198, 4
    %v2221 = vsel %vm2217, %v2201, %v2204
    %v2222 = vsel %vm2220, %v2210, 2102212464
    %v2223 = vsel %vm2219, %v2207, %v2222
    %v2224 = vsel %vm2218, %v2221, %v2223
    %v2225 = vsel %vm2217, %v2204, %v2207
    %v2226 = vsel %vm2220, %v2213, 920167782
    %v2227 = vsel %vm2219, %v2210, %v2226
    %v2228 = vsel %vm2218, %v2225, %v2227
    %v2229 = vsel %vm2217, %v2207, %v2210
    %v2230 = vsel %vm2220, %v2216, 1326507024
    %v2231 = vsel %vm2219, %v2213, %v2230
    %v2232 = vsel %vm2218, %v2229, %v2231
    %v2233 = vshll.u32 %v2193, 8
    %v2234 = vmul.u32.u64.compose %v2233, %v2232
    %v2235 = vextract.low.u32 %v2234
    %v2236 = vextract.high.u32 %v2234
    %v2237 = vmul.u32.u64.compose %v2233, %v2228
    %v2238 = vextract.low.u32 %v2237
    %v2239 = vextract.high.u32 %v2237
    %v2240 = vmul.u32 %v2233, %v2224
    %v2241 = vadd.s32 %v2236, %v2238
    %vm2242 = vc.u32 %v2236, %v2238
    %v2243 = vadd.s32 %v2239, 1
    %v2244 = vsel %vm2242, %v2243, %v2239
    %v2245 = vadd.s32 %v2240, %v2244
    %v2246 = vadd.s32 %v2245, 536870912
    %v2247 = vshrl.u32 %v2246, 30
    %v2248 = vshll.u32 %v2247, 30
    %v2249 = vsub.s32 %v2245, %v2248
    %vm2250 = vcmp.lt.s32.totalorder %v2249, 0
    %v2251 = vsub.s32 0, %v2249
    %v2252 = vsel %vm2250, %v2251, %v2249
    %v2253 = vclz %v2252
    %v2254 = vsub.s32 %v2253, 2
    %vm2255 = vcmp.gt.s32.totalorder 0, %v2254
    %v2256 = vsel %vm2255, 0, %v2254
    %v2257 = vsub.s32 32, %v2256
    %v2258 = vshll.u32 %v2249, %v2256
    %v2259 = vshrl.u32 %v2241, %v2257
    %v2260 = vor.u32 %v2258, %v2259
    %v2261 = vsub.s32 4294967266, %v2256
    %v2262 = vadd.s32 %v2261, 127
    %v2263 = vshll.u32 %v2262, 23
    %v2264 = vor.u32 4788187, %v2263
    %v2265 = vand.u32 2147483647, %v2264
    %v2267 = vcvt.s32.f32 %v2260
    %v2268 = vmul.f32 %v2267, %v2265
    %v2269 = vxor.u32 %v2268, 2147483648
    %v2270 = vsel %vm2187, %v2269, %v2268
    %v2271 = vsub.s32 4, %v2247
    %v2272 = vsel %vm2187, %v2271, %v2247
    %v2273 = vsel %vm2186, %v724, %v2270
    %v2274 = vsel %vm2186, 0, %v2272
    %v2275 = vcosq.f32.pop %v2273
    %v2276 = vsinq.f32.pop %v2273
    %vm2277 = vweird.f32 %v724
    %v2278 = vadd.s32 %v2274, 3
    %v2279 = vand.u32 %v2278, 3
    %vm2280 = vcmp.lt.s32.totalorder %v2279, 2
    %vm2281 = vcmp.eq.s32.totalorder %v2279, 0
    %v2282 = vxor.u32 %v2276, 2147483648
    %v2283 = vsel %vm2281, %v2275, %v2282
    %vm2284 = vcmp.eq.s32.totalorder %v2279, 2
    %v2285 = vxor.u32 %v2275, 2147483648
    %v2286 = vsel %vm2284, %v2285, %v2276
    %v2287 = vsel %vm2280, %v2283, %v2286
    %v2288 = vsel %vm2277, nan, %v2287
    %v2289 = vand.u32 2147483647, %v726
    %vm2290 = vcmp.le.f32.partialorder %v2289, 0.7853982
    %vm2291 = vcmp.lt.s32.totalorder %v726, 0
    %v2292 = vand.u32 %v726, 2139095040
    %v2293 = vshrl.u32 %v2292, 23
    %v2294 = vsub.s32 %v2293, 127
    %v2295 = vand.u32 2147483647, %v726
    %v2296 = vand.u32 %v2295, 8388607
    %v2297 = vor.u32 %v2296, 8388608
    %v2298 = vsub.s32 0, %v2297
    %v2299 = vadd.s32 %v2294, 1
    %vm2300 = vcmp.gt.s32.totalorder %v2299, 0
    %v2301 = vsel %vm2300, %v2299, 0
    %v2302 = vshrl.u32 %v2301, 5
    %v2303 = vand.u32 %v2301, 31
    %v2304 = vsub.s32 32, %v2303
    %v2305 = vshrl.u32 683565275, %v2304
    %v2306 = vshll.u32 683565275, %v2303
    %v2307 = vshrl.u32 2475754826, %v2304
    %v2308 = vor.u32 %v2306, %v2307
    %v2309 = vshll.u32 2475754826, %v2303
    %v2310 = vshrl.u32 2131351028, %v2304
    %v2311 = vor.u32 %v2309, %v2310
    %v2312 = vshll.u32 2131351028, %v2303
    %v2313 = vshrl.u32 2102212464, %v2304
    %v2314 = vor.u32 %v2312, %v2313
    %v2315 = vshll.u32 2102212464, %v2303
    %v2316 = vshrl.u32 920167782, %v2304
    %v2317 = vor.u32 %v2315, %v2316
    %v2318 = vshll.u32 920167782, %v2303
    %v2319 = vshrl.u32 1326507024, %v2304
    %v2320 = vor.u32 %v2318, %v2319
    %vm2321 = vcmp.lt.s32.totalorder %v2302, 1
    %vm2322 = vcmp.lt.s32.totalorder %v2302, 2
    %vm2323 = vcmp.lt.s32.totalorder %v2302, 3
    %vm2324 = vcmp.lt.s32.totalorder %v2302, 4
    %v2325 = vsel %vm2321, %v2305, %v2308
    %v2326 = vsel %vm2324, %v2314, 2102212464
    %v2327 = vsel %vm2323, %v2311, %v2326
    %v2328 = vsel %vm2322, %v2325, %v2327
    %v2329 = vsel %vm2321, %v2308, %v2311
    %v2330 = vsel %vm2324, %v2317, 920167782
    %v2331 = vsel %vm2323, %v2314, %v2330
    %v2332 = vsel %vm2322, %v2329, %v2331
    %v2333 = vsel %vm2321, %v2311, %v2314
    %v2334 = vsel %vm2324, %v2320, 1326507024
    %v2335 = vsel %vm2323, %v2317, %v2334
    %v2336 = vsel %vm2322, %v2333, %v2335
    %v2337 = vshll.u32 %v2297, 8
    %v2338 = vmul.u32.u64.compose %v2337, %v2336
    %v2339 = vextract.low.u32 %v2338
    %v2340 = vextract.high.u32 %v2338
    %v2341 = vmul.u32.u64.compose %v2337, %v2332
    %v2342 = vextract.low.u32 %v2341
    %v2343 = vextract.high.u32 %v2341
    %v2344 = vmul.u32 %v2337, %v2328
    %v2345 = vadd.s32 %v2340, %v2342
    %vm2346 = vc.u32 %v2340, %v2342
    %v2347 = vadd.s32 %v2343, 1
    %v2348 = vsel %vm2346, %v2347, %v2343
    %v2349 = vadd.s32 %v2344, %v2348
    %v2350 = vadd.s32 %v2349, 536870912
    %v2351 = vshrl.u32 %v2350, 30
    %v2352 = vshll.u32 %v2351, 30
    %v2353 = vsub.s32 %v2349, %v2352
    %vm2354 = vcmp.lt.s32.totalorder %v2353, 0
    %v2355 = vsub.s32 0, %v2353
    %v2356 = vsel %vm2354, %v2355, %v2353
    %v2357 = vclz %v2356
    %v2358 = vsub.s32 %v2357, 2
    %vm2359 = vcmp.gt.s32.totalorder 0, %v2358
    %v2360 = vsel %vm2359, 0, %v2358
    %v2361 = vsub.s32 32, %v2360
    %v2362 = vshll.u32 %v2353, %v2360
    %v2363 = vshrl.u32 %v2345, %v2361
    %v2364 = vor.u32 %v2362, %v2363
    %v2365 = vsub.s32 4294967266, %v2360
    %v2366 = vadd.s32 %v2365, 127
    %v2367 = vshll.u32 %v2366, 23
    %v2368 = vor.u32 4788187, %v2367
    %v2369 = vand.u32 2147483647, %v2368
    %v2371 = vcvt.s32.f32 %v2364
    %v2372 = vmul.f32 %v2371, %v2369
    %v2373 = vxor.u32 %v2372, 2147483648
    %v2374 = vsel %vm2291, %v2373, %v2372
    %v2375 = vsub.s32 4, %v2351
    %v2376 = vsel %vm2291, %v2375, %v2351
    %v2377 = vsel %vm2290, %v726, %v2374
    %v2378 = vsel %vm2290, 0, %v2376
    %v2379 = vcosq.f32.pop %v2377
    %v2380 = vsinq.f32.pop %v2377
    %vm2381 = vweird.f32 %v726
    %v2382 = vadd.s32 %v2378, 3
    %v2383 = vand.u32 %v2382, 3
    %vm2384 = vcmp.lt.s32.totalorder %v2383, 2
    %vm2385 = vcmp.eq.s32.totalorder %v2383, 0
    %v2386 = vxor.u32 %v2380, 2147483648
    %v2387 = vsel %vm2385, %v2379, %v2386
    %vm2388 = vcmp.eq.s32.totalorder %v2383, 2
    %v2389 = vxor.u32 %v2379, 2147483648
    %v2390 = vsel %vm2388, %v2389, %v2380
    %v2391 = vsel %vm2384, %v2387, %v2390
    %v2392 = vsel %vm2381, nan, %v2391
    %v2393 = vand.u32 2147483647, %v731
    %vm2394 = vcmp.le.f32.partialorder %v2393, 0.7853982
    %vm2395 = vcmp.lt.s32.totalorder %v731, 0
    %v2396 = vand.u32 %v731, 2139095040
    %v2397 = vshrl.u32 %v2396, 23
    %v2398 = vsub.s32 %v2397, 127
    %v2399 = vand.u32 2147483647, %v731
    %v2400 = vand.u32 %v2399, 8388607
    %v2401 = vor.u32 %v2400, 8388608
    %v2402 = vsub.s32 0, %v2401
    %v2403 = vadd.s32 %v2398, 1
    %vm2404 = vcmp.gt.s32.totalorder %v2403, 0
    %v2405 = vsel %vm2404, %v2403, 0
    %v2406 = vshrl.u32 %v2405, 5
    %v2407 = vand.u32 %v2405, 31
    %v2408 = vsub.s32 32, %v2407
    %v2409 = vshrl.u32 683565275, %v2408
    %v2410 = vshll.u32 683565275, %v2407
    %v2411 = vshrl.u32 2475754826, %v2408
    %v2412 = vor.u32 %v2410, %v2411
    %v2413 = vshll.u32 2475754826, %v2407
    %v2414 = vshrl.u32 2131351028, %v2408
    %v2415 = vor.u32 %v2413, %v2414
    %v2416 = vshll.u32 2131351028, %v2407
    %v2417 = vshrl.u32 2102212464, %v2408
    %v2418 = vor.u32 %v2416, %v2417
    %v2419 = vshll.u32 2102212464, %v2407
    %v2420 = vshrl.u32 920167782, %v2408
    %v2421 = vor.u32 %v2419, %v2420
    %v2422 = vshll.u32 920167782, %v2407
    %v2423 = vshrl.u32 1326507024, %v2408
    %v2424 = vor.u32 %v2422, %v2423
    %vm2425 = vcmp.lt.s32.totalorder %v2406, 1
    %vm2426 = vcmp.lt.s32.totalorder %v2406, 2
    %vm2427 = vcmp.lt.s32.totalorder %v2406, 3
    %vm2428 = vcmp.lt.s32.totalorder %v2406, 4
    %v2429 = vsel %vm2425, %v2409, %v2412
    %v2430 = vsel %vm2428, %v2418, 2102212464
    %v2431 = vsel %vm2427, %v2415, %v2430
    %v2432 = vsel %vm2426, %v2429, %v2431
    %v2433 = vsel %vm2425, %v2412, %v2415
    %v2434 = vsel %vm2428, %v2421, 920167782
    %v2435 = vsel %vm2427, %v2418, %v2434
    %v2436 = vsel %vm2426, %v2433, %v2435
    %v2437 = vsel %vm2425, %v2415, %v2418
    %v2438 = vsel %vm2428, %v2424, 1326507024
    %v2439 = vsel %vm2427, %v2421, %v2438
    %v2440 = vsel %vm2426, %v2437, %v2439
    %v2441 = vshll.u32 %v2401, 8
    %v2442 = vmul.u32.u64.compose %v2441, %v2440
    %v2443 = vextract.low.u32 %v2442
    %v2444 = vextract.high.u32 %v2442
    %v2445 = vmul.u32.u64.compose %v2441, %v2436
    %v2446 = vextract.low.u32 %v2445
    %v2447 = vextract.high.u32 %v2445
    %v2448 = vmul.u32 %v2441, %v2432
    %v2449 = vadd.s32 %v2444, %v2446
    %vm2450 = vc.u32 %v2444, %v2446
    %v2451 = vadd.s32 %v2447, 1
    %v2452 = vsel %vm2450, %v2451, %v2447
    %v2453 = vadd.s32 %v2448, %v2452
    %v2454 = vadd.s32 %v2453, 536870912
    %v2455 = vshrl.u32 %v2454, 30
    %v2456 = vshll.u32 %v2455, 30
    %v2457 = vsub.s32 %v2453, %v2456
    %vm2458 = vcmp.lt.s32.totalorder %v2457, 0
    %v2459 = vsub.s32 0, %v2457
    %v2460 = vsel %vm2458, %v2459, %v2457
    %v2461 = vclz %v2460
    %v2462 = vsub.s32 %v2461, 2
    %vm2463 = vcmp.gt.s32.totalorder 0, %v2462
    %v2464 = vsel %vm2463, 0, %v2462
    %v2465 = vsub.s32 32, %v2464
    %v2466 = vshll.u32 %v2457, %v2464
    %v2467 = vshrl.u32 %v2449, %v2465
    %v2468 = vor.u32 %v2466, %v2467
    %v2469 = vsub.s32 4294967266, %v2464
    %v2470 = vadd.s32 %v2469, 127
    %v2471 = vshll.u32 %v2470, 23
    %v2472 = vor.u32 4788187, %v2471
    %v2473 = vand.u32 2147483647, %v2472
    %v2475 = vcvt.s32.f32 %v2468
    %v2476 = vmul.f32 %v2475, %v2473
    %v2477 = vxor.u32 %v2476, 2147483648
    %v2478 = vsel %vm2395, %v2477, %v2476
    %v2479 = vsub.s32 4, %v2455
    %v2480 = vsel %vm2395, %v2479, %v2455
    %v2481 = vsel %vm2394, %v731, %v2478
    %v2482 = vsel %vm2394, 0, %v2480
    %v2483 = vcosq.f32.pop %v2481
    %v2484 = vsinq.f32.pop %v2481
    %vm2485 = vweird.f32 %v731
    %v2486 = vadd.s32 %v2482, 3
    %v2487 = vand.u32 %v2486, 3
    %vm2488 = vcmp.lt.s32.totalorder %v2487, 2
    %vm2489 = vcmp.eq.s32.totalorder %v2487, 0
    %v2490 = vxor.u32 %v2484, 2147483648
    %v2491 = vsel %vm2489, %v2483, %v2490
    %vm2492 = vcmp.eq.s32.totalorder %v2487, 2
    %v2493 = vxor.u32 %v2483, 2147483648
    %v2494 = vsel %vm2492, %v2493, %v2484
    %v2495 = vsel %vm2488, %v2491, %v2494
    %v2496 = vsel %vm2485, nan, %v2495
    %v2497 = vand.u32 2147483647, %v733
    %vm2498 = vcmp.le.f32.partialorder %v2497, 0.7853982
    %vm2499 = vcmp.lt.s32.totalorder %v733, 0
    %v2500 = vand.u32 %v733, 2139095040
    %v2501 = vshrl.u32 %v2500, 23
    %v2502 = vsub.s32 %v2501, 127
    %v2503 = vand.u32 2147483647, %v733
    %v2504 = vand.u32 %v2503, 8388607
    %v2505 = vor.u32 %v2504, 8388608
    %v2506 = vsub.s32 0, %v2505
    %v2507 = vadd.s32 %v2502, 1
    %vm2508 = vcmp.gt.s32.totalorder %v2507, 0
    %v2509 = vsel %vm2508, %v2507, 0
    %v2510 = vshrl.u32 %v2509, 5
    %v2511 = vand.u32 %v2509, 31
    %v2512 = vsub.s32 32, %v2511
    %v2513 = vshrl.u32 683565275, %v2512
    %v2514 = vshll.u32 683565275, %v2511
    %v2515 = vshrl.u32 2475754826, %v2512
    %v2516 = vor.u32 %v2514, %v2515
    %v2517 = vshll.u32 2475754826, %v2511
    %v2518 = vshrl.u32 2131351028, %v2512
    %v2519 = vor.u32 %v2517, %v2518
    %v2520 = vshll.u32 2131351028, %v2511
    %v2521 = vshrl.u32 2102212464, %v2512
    %v2522 = vor.u32 %v2520, %v2521
    %v2523 = vshll.u32 2102212464, %v2511
    %v2524 = vshrl.u32 920167782, %v2512
    %v2525 = vor.u32 %v2523, %v2524
    %v2526 = vshll.u32 920167782, %v2511
    %v2527 = vshrl.u32 1326507024, %v2512
    %v2528 = vor.u32 %v2526, %v2527
    %vm2529 = vcmp.lt.s32.totalorder %v2510, 1
    %vm2530 = vcmp.lt.s32.totalorder %v2510, 2
    %vm2531 = vcmp.lt.s32.totalorder %v2510, 3
    %vm2532 = vcmp.lt.s32.totalorder %v2510, 4
    %v2533 = vsel %vm2529, %v2513, %v2516
    %v2534 = vsel %vm2532, %v2522, 2102212464
    %v2535 = vsel %vm2531, %v2519, %v2534
    %v2536 = vsel %vm2530, %v2533, %v2535
    %v2537 = vsel %vm2529, %v2516, %v2519
    %v2538 = vsel %vm2532, %v2525, 920167782
    %v2539 = vsel %vm2531, %v2522, %v2538
    %v2540 = vsel %vm2530, %v2537, %v2539
    %v2541 = vsel %vm2529, %v2519, %v2522
    %v2542 = vsel %vm2532, %v2528, 1326507024
    %v2543 = vsel %vm2531, %v2525, %v2542
    %v2544 = vsel %vm2530, %v2541, %v2543
    %v2545 = vshll.u32 %v2505, 8
    %v2546 = vmul.u32.u64.compose %v2545, %v2544
    %v2547 = vextract.low.u32 %v2546
    %v2548 = vextract.high.u32 %v2546
    %v2549 = vmul.u32.u64.compose %v2545, %v2540
    %v2550 = vextract.low.u32 %v2549
    %v2551 = vextract.high.u32 %v2549
    %v2552 = vmul.u32 %v2545, %v2536
    %v2553 = vadd.s32 %v2548, %v2550
    %vm2554 = vc.u32 %v2548, %v2550
    %v2555 = vadd.s32 %v2551, 1
    %v2556 = vsel %vm2554, %v2555, %v2551
    %v2557 = vadd.s32 %v2552, %v2556
    %v2558 = vadd.s32 %v2557, 536870912
    %v2559 = vshrl.u32 %v2558, 30
    %v2560 = vshll.u32 %v2559, 30
    %v2561 = vsub.s32 %v2557, %v2560
    %vm2562 = vcmp.lt.s32.totalorder %v2561, 0
    %v2563 = vsub.s32 0, %v2561
    %v2564 = vsel %vm2562, %v2563, %v2561
    %v2565 = vclz %v2564
    %v2566 = vsub.s32 %v2565, 2
    %vm2567 = vcmp.gt.s32.totalorder 0, %v2566
    %v2568 = vsel %vm2567, 0, %v2566
    %v2569 = vsub.s32 32, %v2568
    %v2570 = vshll.u32 %v2561, %v2568
    %v2571 = vshrl.u32 %v2553, %v2569
    %v2572 = vor.u32 %v2570, %v2571
    %v2573 = vsub.s32 4294967266, %v2568
    %v2574 = vadd.s32 %v2573, 127
    %v2575 = vshll.u32 %v2574, 23
    %v2576 = vor.u32 4788187, %v2575
    %v2577 = vand.u32 2147483647, %v2576
    %v2579 = vcvt.s32.f32 %v2572
    %v2580 = vmul.f32 %v2579, %v2577
    %v2581 = vxor.u32 %v2580, 2147483648
    %v2582 = vsel %vm2499, %v2581, %v2580
    %v2583 = vsub.s32 4, %v2559
    %v2584 = vsel %vm2499, %v2583, %v2559
    %v2585 = vsel %vm2498, %v733, %v2582
    %v2586 = vsel %vm2498, 0, %v2584
    %v2587 = vcosq.f32.pop %v2585
    %v2588 = vsinq.f32.pop %v2585
    %vm2589 = vweird.f32 %v733
    %v2590 = vadd.s32 %v2586, 3
    %v2591 = vand.u32 %v2590, 3
    %vm2592 = vcmp.lt.s32.totalorder %v2591, 2
    %vm2593 = vcmp.eq.s32.totalorder %v2591, 0
    %v2594 = vxor.u32 %v2588, 2147483648
    %v2595 = vsel %vm2593, %v2587, %v2594
    %vm2596 = vcmp.eq.s32.totalorder %v2591, 2
    %v2597 = vxor.u32 %v2587, 2147483648
    %v2598 = vsel %vm2596, %v2597, %v2588
    %v2599 = vsel %vm2592, %v2595, %v2598
    %v2600 = vsel %vm2589, nan, %v2599
    %v2601 = vand.u32 2147483647, %v1322
    %vm2602 = vcmp.le.f32.partialorder %v2601, 0.7853982
    %vm2603 = vcmp.lt.s32.totalorder %v1322, 0
    %v2604 = vand.u32 %v1322, 2139095040
    %v2605 = vshrl.u32 %v2604, 23
    %v2606 = vsub.s32 %v2605, 127
    %v2607 = vand.u32 2147483647, %v1322
    %v2608 = vand.u32 %v2607, 8388607
    %v2609 = vor.u32 %v2608, 8388608
    %v2610 = vsub.s32 0, %v2609
    %v2611 = vadd.s32 %v2606, 1
    %vm2612 = vcmp.gt.s32.totalorder %v2611, 0
    %v2613 = vsel %vm2612, %v2611, 0
    %v2614 = vshrl.u32 %v2613, 5
    %v2615 = vand.u32 %v2613, 31
    %v2616 = vsub.s32 32, %v2615
    %v2617 = vshrl.u32 683565275, %v2616
    %v2618 = vshll.u32 683565275, %v2615
    %v2619 = vshrl.u32 2475754826, %v2616
    %v2620 = vor.u32 %v2618, %v2619
    %v2621 = vshll.u32 2475754826, %v2615
    %v2622 = vshrl.u32 2131351028, %v2616
    %v2623 = vor.u32 %v2621, %v2622
    %v2624 = vshll.u32 2131351028, %v2615
    %v2625 = vshrl.u32 2102212464, %v2616
    %v2626 = vor.u32 %v2624, %v2625
    %v2627 = vshll.u32 2102212464, %v2615
    %v2628 = vshrl.u32 920167782, %v2616
    %v2629 = vor.u32 %v2627, %v2628
    %v2630 = vshll.u32 920167782, %v2615
    %v2631 = vshrl.u32 1326507024, %v2616
    %v2632 = vor.u32 %v2630, %v2631
    %vm2633 = vcmp.lt.s32.totalorder %v2614, 1
    %vm2634 = vcmp.lt.s32.totalorder %v2614, 2
    %vm2635 = vcmp.lt.s32.totalorder %v2614, 3
    %vm2636 = vcmp.lt.s32.totalorder %v2614, 4
    %v2637 = vsel %vm2633, %v2617, %v2620
    %v2638 = vsel %vm2636, %v2626, 2102212464
    %v2639 = vsel %vm2635, %v2623, %v2638
    %v2640 = vsel %vm2634, %v2637, %v2639
    %v2641 = vsel %vm2633, %v2620, %v2623
    %v2642 = vsel %vm2636, %v2629, 920167782
    %v2643 = vsel %vm2635, %v2626, %v2642
    %v2644 = vsel %vm2634, %v2641, %v2643
    %v2645 = vsel %vm2633, %v2623, %v2626
    %v2646 = vsel %vm2636, %v2632, 1326507024
    %v2647 = vsel %vm2635, %v2629, %v2646
    %v2648 = vsel %vm2634, %v2645, %v2647
    %v2649 = vshll.u32 %v2609, 8
    %v2650 = vmul.u32.u64.compose %v2649, %v2648
    %v2651 = vextract.low.u32 %v2650
    %v2652 = vextract.high.u32 %v2650
    %v2653 = vmul.u32.u64.compose %v2649, %v2644
    %v2654 = vextract.low.u32 %v2653
    %v2655 = vextract.high.u32 %v2653
    %v2656 = vmul.u32 %v2649, %v2640
    %v2657 = vadd.s32 %v2652, %v2654
    %vm2658 = vc.u32 %v2652, %v2654
    %v2659 = vadd.s32 %v2655, 1
    %v2660 = vsel %vm2658, %v2659, %v2655
    %v2661 = vadd.s32 %v2656, %v2660
    %v2662 = vadd.s32 %v2661, 536870912
    %v2663 = vshrl.u32 %v2662, 30
    %v2664 = vshll.u32 %v2663, 30
    %v2665 = vsub.s32 %v2661, %v2664
    %vm2666 = vcmp.lt.s32.totalorder %v2665, 0
    %v2667 = vsub.s32 0, %v2665
    %v2668 = vsel %vm2666, %v2667, %v2665
    %v2669 = vclz %v2668
    %v2670 = vsub.s32 %v2669, 2
    %vm2671 = vcmp.gt.s32.totalorder 0, %v2670
    %v2672 = vsel %vm2671, 0, %v2670
    %v2673 = vsub.s32 32, %v2672
    %v2674 = vshll.u32 %v2665, %v2672
    %v2675 = vshrl.u32 %v2657, %v2673
    %v2676 = vor.u32 %v2674, %v2675
    %v2677 = vsub.s32 4294967266, %v2672
    %v2678 = vadd.s32 %v2677, 127
    %v2679 = vshll.u32 %v2678, 23
    %v2680 = vor.u32 4788187, %v2679
    %v2681 = vand.u32 2147483647, %v2680
    %v2683 = vcvt.s32.f32 %v2676
    %v2684 = vmul.f32 %v2683, %v2681
    %v2685 = vxor.u32 %v2684, 2147483648
    %v2686 = vsel %vm2603, %v2685, %v2684
    %v2687 = vsub.s32 4, %v2663
    %v2688 = vsel %vm2603, %v2687, %v2663
    %v2689 = vsel %vm2602, %v1322, %v2686
    %v2690 = vsel %vm2602, 0, %v2688
    %v2691 = vcosq.f32.pop %v2689
    %v2692 = vsinq.f32.pop %v2689
    %vm2693 = vweird.f32 %v1322
    %v2694 = vadd.s32 %v2690, 3
    %v2695 = vand.u32 %v2694, 3
    %vm2696 = vcmp.lt.s32.totalorder %v2695, 2
    %vm2697 = vcmp.eq.s32.totalorder %v2695, 0
    %v2698 = vxor.u32 %v2692, 2147483648
    %v2699 = vsel %vm2697, %v2691, %v2698
    %vm2700 = vcmp.eq.s32.totalorder %v2695, 2
    %v2701 = vxor.u32 %v2691, 2147483648
    %v2702 = vsel %vm2700, %v2701, %v2692
    %v2703 = vsel %vm2696, %v2699, %v2702
    %v2704 = vsel %vm2693, nan, %v2703
    %v2705 = vand.u32 2147483647, %v1324
    %vm2706 = vcmp.le.f32.partialorder %v2705, 0.7853982
    %vm2707 = vcmp.lt.s32.totalorder %v1324, 0
    %v2708 = vand.u32 %v1324, 2139095040
    %v2709 = vshrl.u32 %v2708, 23
    %v2710 = vsub.s32 %v2709, 127
    %v2711 = vand.u32 2147483647, %v1324
    %v2712 = vand.u32 %v2711, 8388607
    %v2713 = vor.u32 %v2712, 8388608
    %v2714 = vsub.s32 0, %v2713
    %v2715 = vadd.s32 %v2710, 1
    %vm2716 = vcmp.gt.s32.totalorder %v2715, 0
    %v2717 = vsel %vm2716, %v2715, 0
    %v2718 = vshrl.u32 %v2717, 5
    %v2719 = vand.u32 %v2717, 31
    %v2720 = vsub.s32 32, %v2719
    %v2721 = vshrl.u32 683565275, %v2720
    %v2722 = vshll.u32 683565275, %v2719
    %v2723 = vshrl.u32 2475754826, %v2720
    %v2724 = vor.u32 %v2722, %v2723
    %v2725 = vshll.u32 2475754826, %v2719
    %v2726 = vshrl.u32 2131351028, %v2720
    %v2727 = vor.u32 %v2725, %v2726
    %v2728 = vshll.u32 2131351028, %v2719
    %v2729 = vshrl.u32 2102212464, %v2720
    %v2730 = vor.u32 %v2728, %v2729
    %v2731 = vshll.u32 2102212464, %v2719
    %v2732 = vshrl.u32 920167782, %v2720
    %v2733 = vor.u32 %v2731, %v2732
    %v2734 = vshll.u32 920167782, %v2719
    %v2735 = vshrl.u32 1326507024, %v2720
    %v2736 = vor.u32 %v2734, %v2735
    %vm2737 = vcmp.lt.s32.totalorder %v2718, 1
    %vm2738 = vcmp.lt.s32.totalorder %v2718, 2
    %vm2739 = vcmp.lt.s32.totalorder %v2718, 3
    %vm2740 = vcmp.lt.s32.totalorder %v2718, 4
    %v2741 = vsel %vm2737, %v2721, %v2724
    %v2742 = vsel %vm2740, %v2730, 2102212464
    %v2743 = vsel %vm2739, %v2727, %v2742
    %v2744 = vsel %vm2738, %v2741, %v2743
    %v2745 = vsel %vm2737, %v2724, %v2727
    %v2746 = vsel %vm2740, %v2733, 920167782
    %v2747 = vsel %vm2739, %v2730, %v2746
    %v2748 = vsel %vm2738, %v2745, %v2747
    %v2749 = vsel %vm2737, %v2727, %v2730
    %v2750 = vsel %vm2740, %v2736, 1326507024
    %v2751 = vsel %vm2739, %v2733, %v2750
    %v2752 = vsel %vm2738, %v2749, %v2751
    %v2753 = vshll.u32 %v2713, 8
    %v2754 = vmul.u32.u64.compose %v2753, %v2752
    %v2755 = vextract.low.u32 %v2754
    %v2756 = vextract.high.u32 %v2754
    %v2757 = vmul.u32.u64.compose %v2753, %v2748
    %v2758 = vextract.low.u32 %v2757
    %v2759 = vextract.high.u32 %v2757
    %v2760 = vmul.u32 %v2753, %v2744
    %v2761 = vadd.s32 %v2756, %v2758
    %vm2762 = vc.u32 %v2756, %v2758
    %v2763 = vadd.s32 %v2759, 1
    %v2764 = vsel %vm2762, %v2763, %v2759
    %v2765 = vadd.s32 %v2760, %v2764
    %v2766 = vadd.s32 %v2765, 536870912
    %v2767 = vshrl.u32 %v2766, 30
    %v2768 = vshll.u32 %v2767, 30
    %v2769 = vsub.s32 %v2765, %v2768
    %vm2770 = vcmp.lt.s32.totalorder %v2769, 0
    %v2771 = vsub.s32 0, %v2769
    %v2772 = vsel %vm2770, %v2771, %v2769
    %v2773 = vclz %v2772
    %v2774 = vsub.s32 %v2773, 2
    %vm2775 = vcmp.gt.s32.totalorder 0, %v2774
    %v2776 = vsel %vm2775, 0, %v2774
    %v2777 = vsub.s32 32, %v2776
    %v2778 = vshll.u32 %v2769, %v2776
    %v2779 = vshrl.u32 %v2761, %v2777
    %v2780 = vor.u32 %v2778, %v2779
    %v2781 = vsub.s32 4294967266, %v2776
    %v2782 = vadd.s32 %v2781, 127
    %v2783 = vshll.u32 %v2782, 23
    %v2784 = vor.u32 4788187, %v2783
    %v2785 = vand.u32 2147483647, %v2784
    %v2787 = vcvt.s32.f32 %v2780
    %v2788 = vmul.f32 %v2787, %v2785
    %v2789 = vxor.u32 %v2788, 2147483648
    %v2790 = vsel %vm2707, %v2789, %v2788
    %v2791 = vsub.s32 4, %v2767
    %v2792 = vsel %vm2707, %v2791, %v2767
    %v2793 = vsel %vm2706, %v1324, %v2790
    %v2794 = vsel %vm2706, 0, %v2792
    %v2795 = vcosq.f32.pop %v2793
    %v2796 = vsinq.f32.pop %v2793
    %vm2797 = vweird.f32 %v1324
    %v2798 = vadd.s32 %v2794, 3
    %v2799 = vand.u32 %v2798, 3
    %vm2800 = vcmp.lt.s32.totalorder %v2799, 2
    %vm2801 = vcmp.eq.s32.totalorder %v2799, 0
    %v2802 = vxor.u32 %v2796, 2147483648
    %v2803 = vsel %vm2801, %v2795, %v2802
    %vm2804 = vcmp.eq.s32.totalorder %v2799, 2
    %v2805 = vxor.u32 %v2795, 2147483648
    %v2806 = vsel %vm2804, %v2805, %v2796
    %v2807 = vsel %vm2800, %v2803, %v2806
    %v2808 = vsel %vm2797, nan, %v2807
    %v2809 = vand.u32 2147483647, %v1329
    %vm2810 = vcmp.le.f32.partialorder %v2809, 0.7853982
    %vm2811 = vcmp.lt.s32.totalorder %v1329, 0
    %v2812 = vand.u32 %v1329, 2139095040
    %v2813 = vshrl.u32 %v2812, 23
    %v2814 = vsub.s32 %v2813, 127
    %v2815 = vand.u32 2147483647, %v1329
    %v2816 = vand.u32 %v2815, 8388607
    %v2817 = vor.u32 %v2816, 8388608
    %v2818 = vsub.s32 0, %v2817
    %v2819 = vadd.s32 %v2814, 1
    %vm2820 = vcmp.gt.s32.totalorder %v2819, 0
    %v2821 = vsel %vm2820, %v2819, 0
    %v2822 = vshrl.u32 %v2821, 5
    %v2823 = vand.u32 %v2821, 31
    %v2824 = vsub.s32 32, %v2823
    %v2825 = vshrl.u32 683565275, %v2824
    %v2826 = vshll.u32 683565275, %v2823
    %v2827 = vshrl.u32 2475754826, %v2824
    %v2828 = vor.u32 %v2826, %v2827
    %v2829 = vshll.u32 2475754826, %v2823
    %v2830 = vshrl.u32 2131351028, %v2824
    %v2831 = vor.u32 %v2829, %v2830
    %v2832 = vshll.u32 2131351028, %v2823
    %v2833 = vshrl.u32 2102212464, %v2824
    %v2834 = vor.u32 %v2832, %v2833
    %v2835 = vshll.u32 2102212464, %v2823
    %v2836 = vshrl.u32 920167782, %v2824
    %v2837 = vor.u32 %v2835, %v2836
    %v2838 = vshll.u32 920167782, %v2823
    %v2839 = vshrl.u32 1326507024, %v2824
    %v2840 = vor.u32 %v2838, %v2839
    %vm2841 = vcmp.lt.s32.totalorder %v2822, 1
    %vm2842 = vcmp.lt.s32.totalorder %v2822, 2
    %vm2843 = vcmp.lt.s32.totalorder %v2822, 3
    %vm2844 = vcmp.lt.s32.totalorder %v2822, 4
    %v2845 = vsel %vm2841, %v2825, %v2828
    %v2846 = vsel %vm2844, %v2834, 2102212464
    %v2847 = vsel %vm2843, %v2831, %v2846
    %v2848 = vsel %vm2842, %v2845, %v2847
    %v2849 = vsel %vm2841, %v2828, %v2831
    %v2850 = vsel %vm2844, %v2837, 920167782
    %v2851 = vsel %vm2843, %v2834, %v2850
    %v2852 = vsel %vm2842, %v2849, %v2851
    %v2853 = vsel %vm2841, %v2831, %v2834
    %v2854 = vsel %vm2844, %v2840, 1326507024
    %v2855 = vsel %vm2843, %v2837, %v2854
    %v2856 = vsel %vm2842, %v2853, %v2855
    %v2857 = vshll.u32 %v2817, 8
    %v2858 = vmul.u32.u64.compose %v2857, %v2856
    %v2859 = vextract.low.u32 %v2858
    %v2860 = vextract.high.u32 %v2858
    %v2861 = vmul.u32.u64.compose %v2857, %v2852
    %v2862 = vextract.low.u32 %v2861
    %v2863 = vextract.high.u32 %v2861
    %v2864 = vmul.u32 %v2857, %v2848
    %v2865 = vadd.s32 %v2860, %v2862
    %vm2866 = vc.u32 %v2860, %v2862
    %v2867 = vadd.s32 %v2863, 1
    %v2868 = vsel %vm2866, %v2867, %v2863
    %v2869 = vadd.s32 %v2864, %v2868
    %v2870 = vadd.s32 %v2869, 536870912
    %v2871 = vshrl.u32 %v2870, 30
    %v2872 = vshll.u32 %v2871, 30
    %v2873 = vsub.s32 %v2869, %v2872
    %vm2874 = vcmp.lt.s32.totalorder %v2873, 0
    %v2875 = vsub.s32 0, %v2873
    %v2876 = vsel %vm2874, %v2875, %v2873
    %v2877 = vclz %v2876
    %v2878 = vsub.s32 %v2877, 2
    %vm2879 = vcmp.gt.s32.totalorder 0, %v2878
    %v2880 = vsel %vm2879, 0, %v2878
    %v2881 = vsub.s32 32, %v2880
    %v2882 = vshll.u32 %v2873, %v2880
    %v2883 = vshrl.u32 %v2865, %v2881
    %v2884 = vor.u32 %v2882, %v2883
    %v2885 = vsub.s32 4294967266, %v2880
    %v2886 = vadd.s32 %v2885, 127
    %v2887 = vshll.u32 %v2886, 23
    %v2888 = vor.u32 4788187, %v2887
    %v2889 = vand.u32 2147483647, %v2888
    %v2891 = vcvt.s32.f32 %v2884
    %v2892 = vmul.f32 %v2891, %v2889
    %v2893 = vxor.u32 %v2892, 2147483648
    %v2894 = vsel %vm2811, %v2893, %v2892
    %v2895 = vsub.s32 4, %v2871
    %v2896 = vsel %vm2811, %v2895, %v2871
    %v2897 = vsel %vm2810, %v1329, %v2894
    %v2898 = vsel %vm2810, 0, %v2896
    %v2899 = vcosq.f32.pop %v2897
    %v2900 = vsinq.f32.pop %v2897
    %vm2901 = vweird.f32 %v1329
    %v2902 = vadd.s32 %v2898, 3
    %v2903 = vand.u32 %v2902, 3
    %vm2904 = vcmp.lt.s32.totalorder %v2903, 2
    %vm2905 = vcmp.eq.s32.totalorder %v2903, 0
    %v2906 = vxor.u32 %v2900, 2147483648
    %v2907 = vsel %vm2905, %v2899, %v2906
    %vm2908 = vcmp.eq.s32.totalorder %v2903, 2
    %v2909 = vxor.u32 %v2899, 2147483648
    %v2910 = vsel %vm2908, %v2909, %v2900
    %v2911 = vsel %vm2904, %v2907, %v2910
    %v2912 = vsel %vm2901, nan, %v2911
    %v2913 = vand.u32 2147483647, %v1331
    %vm2914 = vcmp.le.f32.partialorder %v2913, 0.7853982
    %vm2915 = vcmp.lt.s32.totalorder %v1331, 0
    %v2916 = vand.u32 %v1331, 2139095040
    %v2917 = vshrl.u32 %v2916, 23
    %v2918 = vsub.s32 %v2917, 127
    %v2919 = vand.u32 2147483647, %v1331
    %v2920 = vand.u32 %v2919, 8388607
    %v2921 = vor.u32 %v2920, 8388608
    %v2922 = vsub.s32 0, %v2921
    %v2923 = vadd.s32 %v2918, 1
    %vm2924 = vcmp.gt.s32.totalorder %v2923, 0
    %v2925 = vsel %vm2924, %v2923, 0
    %v2926 = vshrl.u32 %v2925, 5
    %v2927 = vand.u32 %v2925, 31
    %v2928 = vsub.s32 32, %v2927
    %v2929 = vshrl.u32 683565275, %v2928
    %v2930 = vshll.u32 683565275, %v2927
    %v2931 = vshrl.u32 2475754826, %v2928
    %v2932 = vor.u32 %v2930, %v2931
    %v2933 = vshll.u32 2475754826, %v2927
    %v2934 = vshrl.u32 2131351028, %v2928
    %v2935 = vor.u32 %v2933, %v2934
    %v2936 = vshll.u32 2131351028, %v2927
    %v2937 = vshrl.u32 2102212464, %v2928
    %v2938 = vor.u32 %v2936, %v2937
    %v2939 = vshll.u32 2102212464, %v2927
    %v2940 = vshrl.u32 920167782, %v2928
    %v2941 = vor.u32 %v2939, %v2940
    %v2942 = vshll.u32 920167782, %v2927
    %v2943 = vshrl.u32 1326507024, %v2928
    %v2944 = vor.u32 %v2942, %v2943
    %vm2945 = vcmp.lt.s32.totalorder %v2926, 1
    %vm2946 = vcmp.lt.s32.totalorder %v2926, 2
    %vm2947 = vcmp.lt.s32.totalorder %v2926, 3
    %vm2948 = vcmp.lt.s32.totalorder %v2926, 4
    %v2949 = vsel %vm2945, %v2929, %v2932
    %v2950 = vsel %vm2948, %v2938, 2102212464
    %v2951 = vsel %vm2947, %v2935, %v2950
    %v2952 = vsel %vm2946, %v2949, %v2951
    %v2953 = vsel %vm2945, %v2932, %v2935
    %v2954 = vsel %vm2948, %v2941, 920167782
    %v2955 = vsel %vm2947, %v2938, %v2954
    %v2956 = vsel %vm2946, %v2953, %v2955
    %v2957 = vsel %vm2945, %v2935, %v2938
    %v2958 = vsel %vm2948, %v2944, 1326507024
    %v2959 = vsel %vm2947, %v2941, %v2958
    %v2960 = vsel %vm2946, %v2957, %v2959
    %v2961 = vshll.u32 %v2921, 8
    %v2962 = vmul.u32.u64.compose %v2961, %v2960
    %v2963 = vextract.low.u32 %v2962
    %v2964 = vextract.high.u32 %v2962
    %v2965 = vmul.u32.u64.compose %v2961, %v2956
    %v2966 = vextract.low.u32 %v2965
    %v2967 = vextract.high.u32 %v2965
    %v2968 = vmul.u32 %v2961, %v2952
    %v2969 = vadd.s32 %v2964, %v2966
    %vm2970 = vc.u32 %v2964, %v2966
    %v2971 = vadd.s32 %v2967, 1
    %v2972 = vsel %vm2970, %v2971, %v2967
    %v2973 = vadd.s32 %v2968, %v2972
    %v2974 = vadd.s32 %v2973, 536870912
    %v2975 = vshrl.u32 %v2974, 30
    %v2976 = vshll.u32 %v2975, 30
    %v2977 = vsub.s32 %v2973, %v2976
    %vm2978 = vcmp.lt.s32.totalorder %v2977, 0
    %v2979 = vsub.s32 0, %v2977
    %v2980 = vsel %vm2978, %v2979, %v2977
    %v2981 = vclz %v2980
    %v2982 = vsub.s32 %v2981, 2
    %vm2983 = vcmp.gt.s32.totalorder 0, %v2982
    %v2984 = vsel %vm2983, 0, %v2982
    %v2985 = vsub.s32 32, %v2984
    %v2986 = vshll.u32 %v2977, %v2984
    %v2987 = vshrl.u32 %v2969, %v2985
    %v2988 = vor.u32 %v2986, %v2987
    %v2989 = vsub.s32 4294967266, %v2984
    %v2990 = vadd.s32 %v2989, 127
    %v2991 = vshll.u32 %v2990, 23
    %v2992 = vor.u32 4788187, %v2991
    %v2993 = vand.u32 2147483647, %v2992
    %v2995 = vcvt.s32.f32 %v2988
    %v2996 = vmul.f32 %v2995, %v2993
    %v2997 = vxor.u32 %v2996, 2147483648
    %v2998 = vsel %vm2915, %v2997, %v2996
    %v2999 = vsub.s32 4, %v2975
    %v3000 = vsel %vm2915, %v2999, %v2975
    %v3001 = vsel %vm2914, %v1331, %v2998
    %v3002 = vsel %vm2914, 0, %v3000
    %v3003 = vcosq.f32.pop %v3001
    %v3004 = vsinq.f32.pop %v3001
    %vm3005 = vweird.f32 %v1331
    %v3006 = vadd.s32 %v3002, 3
    %v3007 = vand.u32 %v3006, 3
    %vm3008 = vcmp.lt.s32.totalorder %v3007, 2
    %vm3009 = vcmp.eq.s32.totalorder %v3007, 0
    %v3010 = vxor.u32 %v3004, 2147483648
    %v3011 = vsel %vm3009, %v3003, %v3010
    %vm3012 = vcmp.eq.s32.totalorder %v3007, 2
    %v3013 = vxor.u32 %v3003, 2147483648
    %v3014 = vsel %vm3012, %v3013, %v3004
    %v3015 = vsel %vm3008, %v3011, %v3014
    %v3016 = vsel %vm3005, nan, %v3015
    %v3017 = vadd.f32 %v2288, %v2704
    %v3018 = vadd.f32 %v2392, %v2808
    %v3019 = vadd.f32 %v2496, %v2912
    %v3020 = vadd.f32 %v2600, %v3016
    %v3021 = vsel %vm2163, %v3017, 0.0
    %v3022 = vsel %vm2163, %v3018, 0.0
    %v3023 = vsel %vm2164, %v3019, 0.0
    %v3024 = vsel %vm2164, %v3020, 0.0
    %v3025 = vadd.f32 %v3021, %v3023
    %v3026 = vrot.slane %v3025, 4
    %v3027 = vadd.f32 %v3025, %v3026
    %v3028 = vrot.slane %v3027, 2
    %v3029 = vadd.f32 %v3027, %v3028
    %v3030 = vrot.slane %v3029, 1
    %v3031 = vadd.f32 %v3029, %v3030
    %v3032 = vadd.f32 %v3022, %v3024
    %v3033 = vrot.slane %v3032, 4
    %v3034 = vadd.f32 %v3032, %v3033
    %v3035 = vrot.slane %v3034, 2
    %v3036 = vadd.f32 %v3034, %v3035
    %v3037 = vrot.slane %v3036, 1
    %v3038 = vadd.f32 %v3036, %v3037
    %v3039 = vmul.f32 %v3031, 0.0625
    %v3040 = vmul.f32 %v3038, 0.0625
    %3041 = vst [vmem:[#allocation8] sm:$0xff] %v2183
    %3042 = vst [vmem:[#allocation8 + $0x8] sm:$0xff] %v2184
    %3043 = vst [vmem:[#allocation9] sm:$0xff] %v3039
    %3044 = vst [vmem:[#allocation9 + $0x8] sm:$0xff] %v3040
    // Predicated region
    $region26: #{tpu_custom_call.1} parent=1 // pred_check
      _
    $region27: #{tpu_custom_call.1} parent=1 // pred_check_branch
      %3046 = sbr.rel (0) target = $region29
    $region28: #{tpu_custom_call.1} parent=1 // pred_region
      %s3048 = ssub.s32 256, 256
      %3049 = vsyncadd [#allocation4], %s3048
      %s3051 = sshll.u32 [#allocation8], 4
      %s3052 = int_to_ptr.vmem [resolvable:$true] %s3051
      %3054 = dma.vmem_to_hbm [thread:$0]  %s3052, 256, %s3, [#allocation4]
    $region29: #{tpu_custom_call.1} parent=1 // pred_fallthru
      _
    // Predicated region
    $region30: #{tpu_custom_call.1} parent=1 // pred_check
      _
    $region31: #{tpu_custom_call.1} parent=1 // pred_check_branch
      %3056 = sbr.rel (0) target = $region33
    $region32: #{tpu_custom_call.1} parent=1 // pred_region
      %s3058 = ssub.s32 256, 256
      %3059 = vsyncadd [#allocation10], %s3058
      %s3061 = sshll.u32 [#allocation9], 4
      %s3062 = int_to_ptr.vmem [resolvable:$true] %s3061
      %3064 = dma.vmem_to_hbm [thread:$0]  %s3062, 256, %s4, [#allocation10]
    $region33: #{tpu_custom_call.1} parent=1 // pred_fallthru
      _
    // Predicated region
    $region34: #{tpu_custom_call.1} parent=1 // pred_check
      _
    $region35: #{tpu_custom_call.1} parent=1 // pred_check_branch
      %3066 = sbr.rel (0) target = $region37
    $region36: #{tpu_custom_call.1} parent=1 // pred_region
      %3067 = dma.done [#allocation4], 256
    $region37: #{tpu_custom_call.1} parent=1 // pred_fallthru
      _
    // Predicated region
    $region38: #{tpu_custom_call.1} parent=1 // pred_check
      _
    $region39: #{tpu_custom_call.1} parent=1 // pred_check_branch
      %3069 = sbr.rel (0) target = $region41
    $region40: #{tpu_custom_call.1} parent=1 // pred_region
      %3070 = dma.done [#allocation10], 256
    $region41: #{tpu_custom_call.1} parent=1 // pred_fallthru
      _
    %3071 = vsyncpa [#allocation3], 1
    %3072 = vsyncpa [#allocation6], 1
    %3073 = vsyncpa [#allocation4], 1
    %3074 = vsyncpa [#allocation10], 1

</llo_original>
